<compile_context>
chip_gen: v5e
topology: v5e:2x2
jax: 0.10.0
libtpu: 0.0.40
codegen_flags: <defaults>
</compile_context>

<pallas_src>
import jax
import jax.numpy as jnp
import numpy as np
from jax import lax
from jax.experimental import pallas as pl
from jax.experimental.pallas import tpu as pltpu

# ----------------------------- static configuration -------------------------
DIM = 7                 # D: flow dimension (sphere S^D embedded in R^{D+1})
NCOORD = DIM + 1        # number of coordinates = D + 1  (8 -> sublane friendly)
K_INT = DIM - 1         # number of interval transforms
A_MAX = 0.45            # interval-transform amplitude bound (keeps it monotone)
OM_MAX = 0.6            # per-component Moebius bound (0.6*sqrt(2) < 1)
LANES = 128             # batch elements per lane row

# Flat f32 parameter vector layout (lives in SMEM inside the kernel).
OFF_B = 0                               # K_INT interval biases
OFF_W = OFF_B + K_INT                   # K_INT*K_INT context weights (row-major)
OFF_CW1 = OFF_W + K_INT * K_INT         # K_INT circular ctx weights (omega real)
OFF_CW2 = OFF_CW1 + K_INT               # K_INT circular ctx weights (omega imag)
OFF_CB1 = OFF_CW2 + K_INT               # circular bias (real)
OFF_CB2 = OFF_CB1 + 1                   # circular bias (imag)
OFF_CROT = OFF_CB2 + 1                  # cos(rotation)
OFF_SROT = OFF_CROT + 1                 # sin(rotation)
OFF_ROT = OFF_SROT + 1                  # rotation angle (reference only)
OFF_EPS = OFF_ROT + 1                   # epsilon
N_PARAMS = OFF_EPS + 1


def _make_kernel(ordering):
    """Build the per-tile kernel for a fixed (static) coordinate ordering.

    Since y[:, ordering[k]] = y_sphere[:, k], interval coordinate t is written
    directly to output row ordering[t] and the circle pair to rows
    ordering[D-1], ordering[D] (no separate inverse-ordering gather needed).
    """
    # Close the (rho/r)^coeff correction groups after t=1 (exponents 5+4=9) and
    # t=4 (exponents 3+2+1=6) so each group product stays well inside f32 range
    # even when every coordinate sits at the eps clamp.
    GROUP_CLOSE = (1, 4)

    def kernel(params_ref, x_ref, y_ref, ldj_ref):
        # x_ref / y_ref: (NCOORD, TS, 128)   ldj_ref: (TS, 128)   params_ref: SMEM
        eps = params_ref[OFF_EPS]
        eps2 = eps * eps

        inv_cum = None      # prod_{s<t} 1/rho_s   (forward-recursion rescale)
        cumr = None         # prod_{s<t} r_s       (inverse-recursion rescale)
        dydx_prod = None    # running product of the 7 Jacobian diagonal terms
        group = None        # open correction-group product
        ldj = None
        y_int = []

        for t in range(K_INT):
            coeff = K_INT - 1 - t               # = (D - t) - 2

            # ---- forward recursion: peel interval coordinate t --------------
            xt_raw = x_ref[ordering[t]].astype(jnp.float32)   # lane-dense load
            xt = xt_raw if inv_cum is None else xt_raw * inv_cum
            crho = jnp.maximum(1.0 - xt * xt, eps2)           # rho_t^2 (eps-clamped)
            inv_rho = lax.rsqrt(crho)
            inv_cum = inv_rho if inv_cum is None else inv_cum * inv_rho

            # ---- conditioned monotone interval transform ---------------------
            if t == 0:
                pre = jnp.full_like(xt, params_ref[OFF_B + t])
            else:
                pre = params_ref[OFF_W + t * K_INT] * y_int[0]
                for j in range(1, t):
                    pre = pre + params_ref[OFF_W + t * K_INT + j] * y_int[j]
                pre = pre + params_ref[OFF_B + t]
            a = A_MAX * jnp.tanh(pre)
            xt2 = xt * xt
            yt = xt + a * (xt - xt * xt2)
            dterm = 1.0 + a * (1.0 - 3.0 * xt2)
            dydx_prod = dterm if dydx_prod is None else dydx_prod * dterm

            # ---- inverse-recursion piece for this coordinate -----------------
            cr = jnp.maximum(1.0 - yt * yt, eps2)             # r_t^2 (eps-clamped)
            out_t = yt if cumr is None else yt * cumr         # y_t * prod_{s<t} r_s
            y_ref[ordering[t]] = out_t.astype(y_ref.dtype)    # final -> store now

            if coeff > 0:
                inv_r = lax.rsqrt(cr)
                r_t = cr * inv_r
                # correction ratio (rho_t / r_t)^coeff via multiplies only
                ratio = (crho * inv_rho) * inv_r
                rpow = ratio
                for _ in range(coeff - 1):
                    rpow = rpow * ratio
                group = rpow if group is None else group * rpow
                if t in GROUP_CLOSE:
                    gl = jnp.log(group)
                    ldj = -gl if ldj is None else ldj - gl
                    group = None
            else:
                r_t = jnp.sqrt(cr)
            cumr = r_t if cumr is None else cumr * r_t
            y_int.append(yt)

        # remaining 2-vector (circle) after all forward rescales
        c1 = x_ref[ordering[K_INT]].astype(jnp.float32) * inv_cum
        c2 = x_ref[ordering[K_INT + 1]].astype(jnp.float32) * inv_cum

        # ---- conditioned Moebius circle map + fixed rotation -----------------
        p1 = params_ref[OFF_CW1] * y_int[0]
        p2 = params_ref[OFF_CW2] * y_int[0]
        for j in range(1, K_INT):
            p1 = p1 + params_ref[OFF_CW1 + j] * y_int[j]
            p2 = p2 + params_ref[OFF_CW2 + j] * y_int[j]
        p1 = p1 + params_ref[OFF_CB1]
        p2 = p2 + params_ref[OFF_CB2]
        om1 = OM_MAX * jnp.tanh(p1)
        om2 = OM_MAX * jnp.tanh(p2)

        inv_norm = lax.rsqrt(c1 * c1 + c2 * c2)               # as_angle normalisation
        z1 = c1 * inv_norm
        z2 = c2 * inv_norm
        u = 1.0 - om1 * z1 - om2 * z2                         #  Re(1 - conj(om) z)
        v = om1 * z2 - om2 * z1                               # -Im(1 - conj(om) z)
        inv_den = 1.0 / (u * u + v * v)                       # exact reciprocal (1 divide)
        a1 = z1 - om1
        a2 = z2 - om2
        w1 = (a1 * u - a2 * v) * inv_den
        w2 = (a1 * v + a2 * u) * inv_den
        dydx_prod = dydx_prod * ((1.0 - om1 * om1 - om2 * om2) * inv_den)

        crot = params_ref[OFF_CROT]
        srot = params_ref[OFF_SROT]
        yc1 = crot * w1 - srot * w2                           # as_vector(y_D + rotation)
        yc2 = srot * w1 + crot * w2
        y_ref[ordering[K_INT]] = (yc1 * cumr).astype(y_ref.dtype)
        y_ref[ordering[K_INT + 1]] = (yc2 * cumr).astype(y_ref.dtype)

        # ---- ldj = log(prod dydx) - sum coeff*log(rho/r), fused into 3 logs --
        ldj = ldj + jnp.log(dydx_prod)
        ldj_ref[...] = ldj.astype(ldj_ref.dtype)

    return kernel


def recursive_flow_sd_forward(x, params, ordering):
    """Pallas-backed RecursiveFlowSD.forward.  Returns (y, ldj)."""
    n, ncoord = x.shape
    assert ncoord == NCOORD
    assert n % LANES == 0, "batch must be a multiple of 128 (lane-packed layout)"
    ordering = tuple(int(i) for i in ordering)

    rows = n // LANES
    # Sublane tile: EUP-bound kernel with ~15-20 live (ts,128) f32 temps, so
    # ts=16 is comfortably spill-free; ts=32 only for large batches (amortises
    # the ~0.35us per-grid-step overhead, residual spills hide under EUP work).
    # Keep >= 2 tiles whenever rows permits so both v7x TensorCores get work
    # (harmless on single-TC v5e/v6e).
    if rows % 8 != 0:
        ts = rows                          # full-extent block (always legal)
    elif rows >= 128 and rows % 32 == 0:
        ts = 32
    elif rows >= 32 and rows % 16 == 0:
        ts = 16
    elif rows >= 16:
        ts = 8
    else:
        ts = rows
    num_tiles = rows // ts

    # batch-major (N, D+1) -> (coord, sublane-row, lane); element n = s*128 + l.
    # TODO(synk): a coord-major caller could pass (NCOORD, rows, 128) directly and
    # skip this transpose and the inverse one below (extra HBM passes, visible on v7x).
    xt = jnp.transpose(x.astype(jnp.float32)).reshape(NCOORD, rows, LANES)

    kernel = _make_kernel(ordering)
    cost = pl.CostEstimate(
        flops=int(n) * 150,
        transcendentals=int(n) * 26,
        bytes_accessed=int(n) * (2 * NCOORD + 1) * 4,
    )
    yt, ldj = pl.pallas_call(
        kernel,
        out_shape=(
            jax.ShapeDtypeStruct((NCOORD, rows, LANES), x.dtype),
            jax.ShapeDtypeStruct((rows, LANES), x.dtype),
        ),
        grid=(num_tiles,),
        in_specs=[
            pl.BlockSpec(memory_space=pltpu.MemorySpace.SMEM),       # params (scalars)
            pl.BlockSpec((NCOORD, ts, LANES), lambda i: (0, i, 0)),  # x tile
        ],
        out_specs=[
            pl.BlockSpec((NCOORD, ts, LANES), lambda i: (0, i, 0)),  # y tile
            pl.BlockSpec((ts, LANES), lambda i: (i, 0)),             # ldj tile
        ],
        compiler_params=pltpu.CompilerParams(
            dimension_semantics=("parallel",)),
        cost_estimate=cost,
    )(params, xt)

    y = jnp.transpose(yt.reshape(NCOORD, n))
    return y, ldj.reshape(n)


def recursive_flow_sd_reference(x, params, ordering):
    """Pure-JAX transliteration of RecursiveFlowSD.forward (the torch spec)."""
    D = DIM
    p = np.asarray(params)
    b = p[OFF_B:OFF_B + K_INT]
    W = p[OFF_W:OFF_W + K_INT * K_INT].reshape(K_INT, K_INT)
    cw1 = p[OFF_CW1:OFF_CW1 + K_INT]
    cw2 = p[OFF_CW2:OFF_CW2 + K_INT]
    cb1, cb2 = p[OFF_CB1], p[OFF_CB2]
    rot = p[OFF_ROT]
    eps = p[OFF_EPS]
    ordering = [int(i) for i in ordering]
    inverse_ordering = sorted(range(D + 1), key=ordering.__getitem__)

    x = x.astype(jnp.float32)[:, ordering]
    x_sphere = x
    x_intervals, scale_factors = [], []
    for _ in range(D, 1, -1):
        x_i, x_sphere = x_sphere[:, :1], x_sphere[:, 1:]
        safe = (1.0 - x_i ** 2) > eps ** 2
        rho_i = jnp.sqrt(jnp.where(safe, 1.0 - x_i ** 2, eps ** 2))
        x_sphere = jnp.where(safe, x_sphere / rho_i, x_sphere / eps)
        x_intervals.append(x_i)
        scale_factors.append(rho_i)
    x_circle = x_sphere                                   # (N, 2)

    y_intervals = None
    jacobian_diag = None
    for t in range(D - 1):
        x_i = x_intervals[t]
        pre = jnp.full_like(x_i, b[t])
        for j in range(t):
            pre = pre + W[t, j] * y_intervals[:, j:j + 1]
        a = A_MAX * jnp.tanh(pre)
        y_i = x_i + a * (x_i - x_i ** 3)
        dydx_i = 1.0 + a * (1.0 - 3.0 * x_i ** 2)
        y_intervals = y_i if t == 0 else jnp.concatenate([y_intervals, y_i], axis=1)
        jacobian_diag = dydx_i if t == 0 else jnp.concatenate(
            [jacobian_diag, dydx_i], axis=1)

    # circular transform on the angle x_D = as_angle(x_circle)
    x_d = jnp.arctan2(x_circle[:, 1:2], x_circle[:, 0:1])
    s1 = jnp.full_like(x_d, cb1)
    s2 = jnp.full_like(x_d, cb2)
    for j in range(D - 1):
        s1 = s1 + cw1[j] * y_intervals[:, j:j + 1]
        s2 = s2 + cw2[j] * y_intervals[:, j:j + 1]
    om1 = OM_MAX * jnp.tanh(s1)
    om2 = OM_MAX * jnp.tanh(s2)
    z1, z2 = jnp.cos(x_d), jnp.sin(x_d)
    u = 1.0 - om1 * z1 - om2 * z2
    v = om1 * z2 - om2 * z1
    den = u * u + v * v
    w1 = ((z1 - om1) * u - (z2 - om2) * v) / den
    w2 = ((z1 - om1) * v + (z2 - om2) * u) / den
    y_d = jnp.arctan2(w2, w1)
    dydx_d = (1.0 - om1 * om1 - om2 * om2) / den
    jacobian_diag = jnp.concatenate([jacobian_diag, dydx_d], axis=1)
    y_circle = jnp.concatenate(
        [jnp.cos(y_d + rot), jnp.sin(y_d + rot)], axis=1)  # as_vector(y_D + rot)

    y_sphere = y_circle
    y_rest = y_intervals
    scale_factors_inverse = []
    for _ in range(2, D + 1):
        y_rest, y_i = y_rest[:, :-1], y_rest[:, -1:]
        safe = (1.0 - y_i ** 2) > eps ** 2
        r_i = jnp.sqrt(jnp.where(safe, 1.0 - y_i ** 2, eps ** 2))
        y_sphere = jnp.where(safe, y_sphere * r_i, y_sphere * eps)
        y_sphere = jnp.concatenate([y_i, y_sphere], axis=1)
        scale_factors_inverse.insert(0, r_i)

    y = y_sphere[:, inverse_ordering]
    ldj = jnp.sum(jnp.log(jacobian_diag), axis=1)
    for d_i, rho_i, r_i in zip(range(D, 1, -1), scale_factors, scale_factors_inverse):
        ldj = ldj - (d_i - 2) * jnp.log(rho_i / r_i)[:, 0]
    return y, ldj


if __name__ == "__main__":
    key = jax.random.PRNGKey(0)
    kx, kperm, krot, kb, kw, kc1, kc2, kcb = jax.random.split(key, 8)

    N = 2048                                           # batch of points on S^7
    x = jax.random.normal(kx, (N, NCOORD), dtype=jnp.float32)
    x = x / jnp.linalg.norm(x, axis=1, keepdims=True)

    # coordinate ordering (the spec's `ordering`, already 0-based here)
    ordering = tuple(int(i) for i in np.asarray(jax.random.permutation(kperm, NCOORD)))

    rotation = float(jax.random.uniform(krot, (), minval=0.0, maxval=2.0 * np.pi))
    epsilon = 1e-3
    b = 0.5 * jax.random.normal(kb, (K_INT,), dtype=jnp.float32)
    W = 0.5 * jax.random.normal(kw, (K_INT, K_INT), dtype=jnp.float32)
    cw1 = 0.5 * jax.random.normal(kc1, (K_INT,), dtype=jnp.float32)
    cw2 = 0.5 * jax.random.normal(kc2, (K_INT,), dtype=jnp.float32)
    cb = 0.5 * jax.random.normal(kcb, (2,), dtype=jnp.float32)

    params = jnp.concatenate([
        b, W.reshape(-1), cw1, cw2, cb,
        jnp.array([np.cos(rotation), np.sin(rotation), rotation, epsilon],
                  dtype=jnp.float32),
    ]).astype(jnp.float32)
    assert params.shape == (N_PARAMS,)

    fwd = jax.jit(recursive_flow_sd_forward, static_argnums=2)
    y, ldj = fwd(x, params, ordering)
    jax.block_until_ready((y, ldj))

    y_ref, ldj_ref = recursive_flow_sd_reference(x, params, ordering)
    np.testing.assert_allclose(np.asarray(y), np.asarray(y_ref), rtol=1e-4, atol=2e-5)
    np.testing.assert_allclose(np.asarray(ldj), np.asarray(ldj_ref), rtol=1e-4, atol=2e-4)

    print("KERNEL_OK")
</pallas_src>

<mosaic_0001>
module attributes {stable_mosaic.version = 11 : i64} {
  func.func @kernel(%arg0: i32, %arg1: memref<60xf32, #tpu.memory_space<smem>>, %arg2: memref<8x8x128xf32, #tpu.memory_space<vmem>>, %arg3: memref<8x8x128xf32, #tpu.memory_space<vmem>>, %arg4: memref<8x128xf32, #tpu.memory_space<vmem>>) attributes {dimension_semantics = [#tpu.dimension_semantics<parallel>], iteration_bounds = array<i64: 2>, scalar_prefetch = 0 : i64, scratch_operands = 0 : i64, tpu.core_type = #tpu.core_type<tc>, window_params = [{transform_indices = @transform_0, window_bounds = array<i64: 60>}, {transform_indices = @transform_1, window_bounds = array<i64: 8, 8, 128>}, {transform_indices = @transform_2, window_bounds = array<i64: 8, 8, 128>}, {transform_indices = @transform_3, window_bounds = array<i64: 8, 128>}]} {
    %c59 = arith.constant 59 : index
    %0 = memref.load %arg1[%c59] : memref<60xf32, #tpu.memory_space<smem>>
    %1 = arith.mulf %0, %0 : f32
    %c0 = arith.constant 0 : index
    %c0_0 = arith.constant 0 : index
    %c0_1 = arith.constant 0 : index
    %2 = vector.load %arg2[%c0, %c0_0, %c0_1] : memref<8x8x128xf32, #tpu.memory_space<vmem>>, vector<1x8x128xf32>
    %3 = vector.shape_cast %2 : vector<1x8x128xf32> to vector<8x128xf32>
    %4 = arith.mulf %3, %3 : vector<8x128xf32>
    %cst = arith.constant 1.000000e+00 : f32
    %5 = vector.broadcast %cst : f32 to vector<8x128xf32>
    %6 = arith.subf %5, %4 : vector<8x128xf32>
    %7 = vector.broadcast %1 : f32 to vector<8x128xf32>
    %8 = arith.maximumf %6, %7 : vector<8x128xf32>
    %9 = math.rsqrt %8 : vector<8x128xf32>
    %c0_2 = arith.constant 0 : index
    %10 = memref.load %arg1[%c0_2] : memref<60xf32, #tpu.memory_space<smem>>
    %11 = vector.broadcast %10 : f32 to vector<8x128xf32>
    %12 = math.tanh %11 : vector<8x128xf32>
    %cst_3 = arith.constant 4.500000e-01 : f32
    %13 = vector.broadcast %cst_3 : f32 to vector<8x128xf32>
    %14 = arith.mulf %13, %12 : vector<8x128xf32>
    %15 = arith.mulf %3, %3 : vector<8x128xf32>
    %16 = arith.mulf %3, %15 : vector<8x128xf32>
    %17 = arith.subf %3, %16 : vector<8x128xf32>
    %18 = arith.mulf %14, %17 : vector<8x128xf32>
    %19 = arith.addf %3, %18 : vector<8x128xf32>
    %cst_4 = arith.constant 3.000000e+00 : f32
    %20 = vector.broadcast %cst_4 : f32 to vector<8x128xf32>
    %21 = arith.mulf %20, %15 : vector<8x128xf32>
    %cst_5 = arith.constant 1.000000e+00 : f32
    %22 = vector.broadcast %cst_5 : f32 to vector<8x128xf32>
    %23 = arith.subf %22, %21 : vector<8x128xf32>
    %24 = arith.mulf %14, %23 : vector<8x128xf32>
    %cst_6 = arith.constant 1.000000e+00 : f32
    %25 = vector.broadcast %cst_6 : f32 to vector<8x128xf32>
    %26 = arith.addf %25, %24 : vector<8x128xf32>
    %27 = arith.mulf %19, %19 : vector<8x128xf32>
    %cst_7 = arith.constant 1.000000e+00 : f32
    %28 = vector.broadcast %cst_7 : f32 to vector<8x128xf32>
    %29 = arith.subf %28, %27 : vector<8x128xf32>
    %30 = vector.broadcast %1 : f32 to vector<8x128xf32>
    %31 = arith.maximumf %29, %30 : vector<8x128xf32>
    %c0_8 = arith.constant 0 : index
    %c0_9 = arith.constant 0 : index
    %c0_10 = arith.constant 0 : index
    %32 = vector.load %arg3[%c0_8, %c0_9, %c0_10] : memref<8x8x128xf32, #tpu.memory_space<vmem>>, vector<1x8x128xf32>
    %33 = vector.shape_cast %32 : vector<1x8x128xf32> to vector<8x128xf32>
    %34 = vector.shape_cast %19 : vector<8x128xf32> to vector<1x8x128xf32>
    tpu.vector_store %arg3[%c0_8, %c0_9, %c0_10], %34 {strides = array<i32>} : memref<8x8x128xf32, #tpu.memory_space<vmem>>, vector<1x8x128xf32>,
    %35 = math.rsqrt %31 : vector<8x128xf32>
    %36 = arith.mulf %31, %35 : vector<8x128xf32>
    %37 = arith.mulf %8, %9 : vector<8x128xf32>
    %38 = arith.mulf %37, %35 : vector<8x128xf32>
    %39 = arith.mulf %38, %38 : vector<8x128xf32>
    %40 = arith.mulf %39, %38 : vector<8x128xf32>
    %41 = arith.mulf %40, %38 : vector<8x128xf32>
    %42 = arith.mulf %41, %38 : vector<8x128xf32>
    %c3 = arith.constant 3 : index
    %c0_11 = arith.constant 0 : index
    %c0_12 = arith.constant 0 : index
    %43 = vector.load %arg2[%c3, %c0_11, %c0_12] : memref<8x8x128xf32, #tpu.memory_space<vmem>>, vector<1x8x128xf32>
    %44 = vector.shape_cast %43 : vector<1x8x128xf32> to vector<8x128xf32>
    %45 = arith.mulf %44, %9 : vector<8x128xf32>
    %46 = arith.mulf %45, %45 : vector<8x128xf32>
    %cst_13 = arith.constant 1.000000e+00 : f32
    %47 = vector.broadcast %cst_13 : f32 to vector<8x128xf32>
    %48 = arith.subf %47, %46 : vector<8x128xf32>
    %49 = vector.broadcast %1 : f32 to vector<8x128xf32>
    %50 = arith.maximumf %48, %49 : vector<8x128xf32>
    %51 = math.rsqrt %50 : vector<8x128xf32>
    %52 = arith.mulf %9, %51 : vector<8x128xf32>
    %c12 = arith.constant 12 : index
    %53 = memref.load %arg1[%c12] : memref<60xf32, #tpu.memory_space<smem>>
    %54 = vector.broadcast %53 : f32 to vector<8x128xf32>
    %55 = arith.mulf %54, %19 : vector<8x128xf32>
    %c1 = arith.constant 1 : index
    %56 = memref.load %arg1[%c1] : memref<60xf32, #tpu.memory_space<smem>>
    %57 = vector.broadcast %56 : f32 to vector<8x128xf32>
    %58 = arith.addf %55, %57 : vector<8x128xf32>
    %59 = math.tanh %58 : vector<8x128xf32>
    %cst_14 = arith.constant 4.500000e-01 : f32
    %60 = vector.broadcast %cst_14 : f32 to vector<8x128xf32>
    %61 = arith.mulf %60, %59 : vector<8x128xf32>
    %62 = arith.mulf %45, %45 : vector<8x128xf32>
    %63 = arith.mulf %45, %62 : vector<8x128xf32>
    %64 = arith.subf %45, %63 : vector<8x128xf32>
    %65 = arith.mulf %61, %64 : vector<8x128xf32>
    %66 = arith.addf %45, %65 : vector<8x128xf32>
    %cst_15 = arith.constant 3.000000e+00 : f32
    %67 = vector.broadcast %cst_15 : f32 to vector<8x128xf32>
    %68 = arith.mulf %67, %62 : vector<8x128xf32>
    %cst_16 = arith.constant 1.000000e+00 : f32
    %69 = vector.broadcast %cst_16 : f32 to vector<8x128xf32>
    %70 = arith.subf %69, %68 : vector<8x128xf32>
    %71 = arith.mulf %61, %70 : vector<8x128xf32>
    %cst_17 = arith.constant 1.000000e+00 : f32
    %72 = vector.broadcast %cst_17 : f32 to vector<8x128xf32>
    %73 = arith.addf %72, %71 : vector<8x128xf32>
    %74 = arith.mulf %26, %73 : vector<8x128xf32>
    %75 = arith.mulf %66, %66 : vector<8x128xf32>
    %cst_18 = arith.constant 1.000000e+00 : f32
    %76 = vector.broadcast %cst_18 : f32 to vector<8x128xf32>
    %77 = arith.subf %76, %75 : vector<8x128xf32>
    %78 = vector.broadcast %1 : f32 to vector<8x128xf32>
    %79 = arith.maximumf %77, %78 : vector<8x128xf32>
    %80 = arith.mulf %66, %36 : vector<8x128xf32>
    %c3_19 = arith.constant 3 : index
    %c0_20 = arith.constant 0 : index
    %c0_21 = arith.constant 0 : index
    %81 = vector.load %arg3[%c3_19, %c0_20, %c0_21] : memref<8x8x128xf32, #tpu.memory_space<vmem>>, vector<1x8x128xf32>
    %82 = vector.shape_cast %81 : vector<1x8x128xf32> to vector<8x128xf32>
    %83 = vector.shape_cast %80 : vector<8x128xf32> to vector<1x8x128xf32>
    tpu.vector_store %arg3[%c3_19, %c0_20, %c0_21], %83 {strides = array<i32>} : memref<8x8x128xf32, #tpu.memory_space<vmem>>, vector<1x8x128xf32>,
    %84 = math.rsqrt %79 : vector<8x128xf32>
    %85 = arith.mulf %79, %84 : vector<8x128xf32>
    %86 = arith.mulf %50, %51 : vector<8x128xf32>
    %87 = arith.mulf %86, %84 : vector<8x128xf32>
    %88 = arith.mulf %87, %87 : vector<8x128xf32>
    %89 = arith.mulf %88, %87 : vector<8x128xf32>
    %90 = arith.mulf %89, %87 : vector<8x128xf32>
    %91 = arith.mulf %42, %90 : vector<8x128xf32>
    %92 = math.log %91 : vector<8x128xf32>
    %cst_22 = arith.constant 0.000000e+00 : f32
    %93 = vector.broadcast %cst_22 : f32 to vector<8x128xf32>
    %94 = arith.subf %93, %92 : vector<8x128xf32>
    %95 = arith.mulf %36, %85 : vector<8x128xf32>
    %c5 = arith.constant 5 : index
    %c0_23 = arith.constant 0 : index
    %c0_24 = arith.constant 0 : index
    %96 = vector.load %arg2[%c5, %c0_23, %c0_24] : memref<8x8x128xf32, #tpu.memory_space<vmem>>, vector<1x8x128xf32>
    %97 = vector.shape_cast %96 : vector<1x8x128xf32> to vector<8x128xf32>
    %98 = arith.mulf %97, %52 : vector<8x128xf32>
    %99 = arith.mulf %98, %98 : vector<8x128xf32>
    %cst_25 = arith.constant 1.000000e+00 : f32
    %100 = vector.broadcast %cst_25 : f32 to vector<8x128xf32>
    %101 = arith.subf %100, %99 : vector<8x128xf32>
    %102 = vector.broadcast %1 : f32 to vector<8x128xf32>
    %103 = arith.maximumf %101, %102 : vector<8x128xf32>
    %104 = math.rsqrt %103 : vector<8x128xf32>
    %105 = arith.mulf %52, %104 : vector<8x128xf32>
    %c18 = arith.constant 18 : index
    %106 = memref.load %arg1[%c18] : memref<60xf32, #tpu.memory_space<smem>>
    %107 = vector.broadcast %106 : f32 to vector<8x128xf32>
    %108 = arith.mulf %107, %19 : vector<8x128xf32>
    %c19 = arith.constant 19 : index
    %109 = memref.load %arg1[%c19] : memref<60xf32, #tpu.memory_space<smem>>
    %110 = vector.broadcast %109 : f32 to vector<8x128xf32>
    %111 = arith.mulf %110, %66 : vector<8x128xf32>
    %112 = arith.addf %108, %111 : vector<8x128xf32>
    %c2 = arith.constant 2 : index
    %113 = memref.load %arg1[%c2] : memref<60xf32, #tpu.memory_space<smem>>
    %114 = vector.broadcast %113 : f32 to vector<8x128xf32>
    %115 = arith.addf %112, %114 : vector<8x128xf32>
    %116 = math.tanh %115 : vector<8x128xf32>
    %cst_26 = arith.constant 4.500000e-01 : f32
    %117 = vector.broadcast %cst_26 : f32 to vector<8x128xf32>
    %118 = arith.mulf %117, %116 : vector<8x128xf32>
    %119 = arith.mulf %98, %98 : vector<8x128xf32>
    %120 = arith.mulf %98, %119 : vector<8x128xf32>
    %121 = arith.subf %98, %120 : vector<8x128xf32>
    %122 = arith.mulf %118, %121 : vector<8x128xf32>
    %123 = arith.addf %98, %122 : vector<8x128xf32>
    %cst_27 = arith.constant 3.000000e+00 : f32
    %124 = vector.broadcast %cst_27 : f32 to vector<8x128xf32>
    %125 = arith.mulf %124, %119 : vector<8x128xf32>
    %cst_28 = arith.constant 1.000000e+00 : f32
    %126 = vector.broadcast %cst_28 : f32 to vector<8x128xf32>
    %127 = arith.subf %126, %125 : vector<8x128xf32>
    %128 = arith.mulf %118, %127 : vector<8x128xf32>
    %cst_29 = arith.constant 1.000000e+00 : f32
    %129 = vector.broadcast %cst_29 : f32 to vector<8x128xf32>
    %130 = arith.addf %129, %128 : vector<8x128xf32>
    %131 = arith.mulf %74, %130 : vector<8x128xf32>
    %132 = arith.mulf %123, %123 : vector<8x128xf32>
    %cst_30 = arith.constant 1.000000e+00 : f32
    %133 = vector.broadcast %cst_30 : f32 to vector<8x128xf32>
    %134 = arith.subf %133, %132 : vector<8x128xf32>
    %135 = vector.broadcast %1 : f32 to vector<8x128xf32>
    %136 = arith.maximumf %134, %135 : vector<8x128xf32>
    %137 = arith.mulf %123, %95 : vector<8x128xf32>
    %c5_31 = arith.constant 5 : index
    %c0_32 = arith.constant 0 : index
    %c0_33 = arith.constant 0 : index
    %138 = vector.load %arg3[%c5_31, %c0_32, %c0_33] : memref<8x8x128xf32, #tpu.memory_space<vmem>>, vector<1x8x128xf32>
    %139 = vector.shape_cast %138 : vector<1x8x128xf32> to vector<8x128xf32>
    %140 = vector.shape_cast %137 : vector<8x128xf32> to vector<1x8x128xf32>
    tpu.vector_store %arg3[%c5_31, %c0_32, %c0_33], %140 {strides = array<i32>} : memref<8x8x128xf32, #tpu.memory_space<vmem>>, vector<1x8x128xf32>,
    %141 = math.rsqrt %136 : vector<8x128xf32>
    %142 = arith.mulf %136, %141 : vector<8x128xf32>
    %143 = arith.mulf %103, %104 : vector<8x128xf32>
    %144 = arith.mulf %143, %141 : vector<8x128xf32>
    %145 = arith.mulf %144, %144 : vector<8x128xf32>
    %146 = arith.mulf %145, %144 : vector<8x128xf32>
    %147 = arith.mulf %95, %142 : vector<8x128xf32>
    %c1_34 = arith.constant 1 : index
    %c0_35 = arith.constant 0 : index
    %c0_36 = arith.constant 0 : index
    %148 = vector.load %arg2[%c1_34, %c0_35, %c0_36] : memref<8x8x128xf32, #tpu.memory_space<vmem>>, vector<1x8x128xf32>
    %149 = vector.shape_cast %148 : vector<1x8x128xf32> to vector<8x128xf32>
    %150 = arith.mulf %149, %105 : vector<8x128xf32>
    %151 = arith.mulf %150, %150 : vector<8x128xf32>
    %cst_37 = arith.constant 1.000000e+00 : f32
    %152 = vector.broadcast %cst_37 : f32 to vector<8x128xf32>
    %153 = arith.subf %152, %151 : vector<8x128xf32>
    %154 = vector.broadcast %1 : f32 to vector<8x128xf32>
    %155 = arith.maximumf %153, %154 : vector<8x128xf32>
    %156 = math.rsqrt %155 : vector<8x128xf32>
    %157 = arith.mulf %105, %156 : vector<8x128xf32>
    %c24 = arith.constant 24 : index
    %158 = memref.load %arg1[%c24] : memref<60xf32, #tpu.memory_space<smem>>
    %159 = vector.broadcast %158 : f32 to vector<8x128xf32>
    %160 = arith.mulf %159, %19 : vector<8x128xf32>
    %c25 = arith.constant 25 : index
    %161 = memref.load %arg1[%c25] : memref<60xf32, #tpu.memory_space<smem>>
    %162 = vector.broadcast %161 : f32 to vector<8x128xf32>
    %163 = arith.mulf %162, %66 : vector<8x128xf32>
    %164 = arith.addf %160, %163 : vector<8x128xf32>
    %c26 = arith.constant 26 : index
    %165 = memref.load %arg1[%c26] : memref<60xf32, #tpu.memory_space<smem>>
    %166 = vector.broadcast %165 : f32 to vector<8x128xf32>
    %167 = arith.mulf %166, %123 : vector<8x128xf32>
    %168 = arith.addf %164, %167 : vector<8x128xf32>
    %c3_38 = arith.constant 3 : index
    %169 = memref.load %arg1[%c3_38] : memref<60xf32, #tpu.memory_space<smem>>
    %170 = vector.broadcast %169 : f32 to vector<8x128xf32>
    %171 = arith.addf %168, %170 : vector<8x128xf32>
    %172 = math.tanh %171 : vector<8x128xf32>
    %cst_39 = arith.constant 4.500000e-01 : f32
    %173 = vector.broadcast %cst_39 : f32 to vector<8x128xf32>
    %174 = arith.mulf %173, %172 : vector<8x128xf32>
    %175 = arith.mulf %150, %150 : vector<8x128xf32>
    %176 = arith.mulf %150, %175 : vector<8x128xf32>
    %177 = arith.subf %150, %176 : vector<8x128xf32>
    %178 = arith.mulf %174, %177 : vector<8x128xf32>
    %179 = arith.addf %150, %178 : vector<8x128xf32>
    %cst_40 = arith.constant 3.000000e+00 : f32
    %180 = vector.broadcast %cst_40 : f32 to vector<8x128xf32>
    %181 = arith.mulf %180, %175 : vector<8x128xf32>
    %cst_41 = arith.constant 1.000000e+00 : f32
    %182 = vector.broadcast %cst_41 : f32 to vector<8x128xf32>
    %183 = arith.subf %182, %181 : vector<8x128xf32>
    %184 = arith.mulf %174, %183 : vector<8x128xf32>
    %cst_42 = arith.constant 1.000000e+00 : f32
    %185 = vector.broadcast %cst_42 : f32 to vector<8x128xf32>
    %186 = arith.addf %185, %184 : vector<8x128xf32>
    %187 = arith.mulf %131, %186 : vector<8x128xf32>
    %188 = arith.mulf %179, %179 : vector<8x128xf32>
    %cst_43 = arith.constant 1.000000e+00 : f32
    %189 = vector.broadcast %cst_43 : f32 to vector<8x128xf32>
    %190 = arith.subf %189, %188 : vector<8x128xf32>
    %191 = vector.broadcast %1 : f32 to vector<8x128xf32>
    %192 = arith.maximumf %190, %191 : vector<8x128xf32>
    %193 = arith.mulf %179, %147 : vector<8x128xf32>
    %c1_44 = arith.constant 1 : index
    %c0_45 = arith.constant 0 : index
    %c0_46 = arith.constant 0 : index
    %194 = vector.load %arg3[%c1_44, %c0_45, %c0_46] : memref<8x8x128xf32, #tpu.memory_space<vmem>>, vector<1x8x128xf32>
    %195 = vector.shape_cast %194 : vector<1x8x128xf32> to vector<8x128xf32>
    %196 = vector.shape_cast %193 : vector<8x128xf32> to vector<1x8x128xf32>
    tpu.vector_store %arg3[%c1_44, %c0_45, %c0_46], %196 {strides = array<i32>} : memref<8x8x128xf32, #tpu.memory_space<vmem>>, vector<1x8x128xf32>,
    %197 = math.rsqrt %192 : vector<8x128xf32>
    %198 = arith.mulf %192, %197 : vector<8x128xf32>
    %199 = arith.mulf %155, %156 : vector<8x128xf32>
    %200 = arith.mulf %199, %197 : vector<8x128xf32>
    %201 = arith.mulf %200, %200 : vector<8x128xf32>
    %202 = arith.mulf %146, %201 : vector<8x128xf32>
    %203 = arith.mulf %147, %198 : vector<8x128xf32>
    %c4 = arith.constant 4 : index
    %c0_47 = arith.constant 0 : index
    %c0_48 = arith.constant 0 : index
    %204 = vector.load %arg2[%c4, %c0_47, %c0_48] : memref<8x8x128xf32, #tpu.memory_space<vmem>>, vector<1x8x128xf32>
    %205 = vector.shape_cast %204 : vector<1x8x128xf32> to vector<8x128xf32>
    %206 = arith.mulf %205, %157 : vector<8x128xf32>
    %207 = arith.mulf %206, %206 : vector<8x128xf32>
    %cst_49 = arith.constant 1.000000e+00 : f32
    %208 = vector.broadcast %cst_49 : f32 to vector<8x128xf32>
    %209 = arith.subf %208, %207 : vector<8x128xf32>
    %210 = vector.broadcast %1 : f32 to vector<8x128xf32>
    %211 = arith.maximumf %209, %210 : vector<8x128xf32>
    %212 = math.rsqrt %211 : vector<8x128xf32>
    %213 = arith.mulf %157, %212 : vector<8x128xf32>
    %c30 = arith.constant 30 : index
    %214 = memref.load %arg1[%c30] : memref<60xf32, #tpu.memory_space<smem>>
    %215 = vector.broadcast %214 : f32 to vector<8x128xf32>
    %216 = arith.mulf %215, %19 : vector<8x128xf32>
    %c31 = arith.constant 31 : index
    %217 = memref.load %arg1[%c31] : memref<60xf32, #tpu.memory_space<smem>>
    %218 = vector.broadcast %217 : f32 to vector<8x128xf32>
    %219 = arith.mulf %218, %66 : vector<8x128xf32>
    %220 = arith.addf %216, %219 : vector<8x128xf32>
    %c32 = arith.constant 32 : index
    %221 = memref.load %arg1[%c32] : memref<60xf32, #tpu.memory_space<smem>>
    %222 = vector.broadcast %221 : f32 to vector<8x128xf32>
    %223 = arith.mulf %222, %123 : vector<8x128xf32>
    %224 = arith.addf %220, %223 : vector<8x128xf32>
    %c33 = arith.constant 33 : index
    %225 = memref.load %arg1[%c33] : memref<60xf32, #tpu.memory_space<smem>>
    %226 = vector.broadcast %225 : f32 to vector<8x128xf32>
    %227 = arith.mulf %226, %179 : vector<8x128xf32>
    %228 = arith.addf %224, %227 : vector<8x128xf32>
    %c4_50 = arith.constant 4 : index
    %229 = memref.load %arg1[%c4_50] : memref<60xf32, #tpu.memory_space<smem>>
    %230 = vector.broadcast %229 : f32 to vector<8x128xf32>
    %231 = arith.addf %228, %230 : vector<8x128xf32>
    %232 = math.tanh %231 : vector<8x128xf32>
    %cst_51 = arith.constant 4.500000e-01 : f32
    %233 = vector.broadcast %cst_51 : f32 to vector<8x128xf32>
    %234 = arith.mulf %233, %232 : vector<8x128xf32>
    %235 = arith.mulf %206, %206 : vector<8x128xf32>
    %236 = arith.mulf %206, %235 : vector<8x128xf32>
    %237 = arith.subf %206, %236 : vector<8x128xf32>
    %238 = arith.mulf %234, %237 : vector<8x128xf32>
    %239 = arith.addf %206, %238 : vector<8x128xf32>
    %cst_52 = arith.constant 3.000000e+00 : f32
    %240 = vector.broadcast %cst_52 : f32 to vector<8x128xf32>
    %241 = arith.mulf %240, %235 : vector<8x128xf32>
    %cst_53 = arith.constant 1.000000e+00 : f32
    %242 = vector.broadcast %cst_53 : f32 to vector<8x128xf32>
    %243 = arith.subf %242, %241 : vector<8x128xf32>
    %244 = arith.mulf %234, %243 : vector<8x128xf32>
    %cst_54 = arith.constant 1.000000e+00 : f32
    %245 = vector.broadcast %cst_54 : f32 to vector<8x128xf32>
    %246 = arith.addf %245, %244 : vector<8x128xf32>
    %247 = arith.mulf %187, %246 : vector<8x128xf32>
    %248 = arith.mulf %239, %239 : vector<8x128xf32>
    %cst_55 = arith.constant 1.000000e+00 : f32
    %249 = vector.broadcast %cst_55 : f32 to vector<8x128xf32>
    %250 = arith.subf %249, %248 : vector<8x128xf32>
    %251 = vector.broadcast %1 : f32 to vector<8x128xf32>
    %252 = arith.maximumf %250, %251 : vector<8x128xf32>
    %253 = arith.mulf %239, %203 : vector<8x128xf32>
    %c4_56 = arith.constant 4 : index
    %c0_57 = arith.constant 0 : index
    %c0_58 = arith.constant 0 : index
    %254 = vector.load %arg3[%c4_56, %c0_57, %c0_58] : memref<8x8x128xf32, #tpu.memory_space<vmem>>, vector<1x8x128xf32>
    %255 = vector.shape_cast %254 : vector<1x8x128xf32> to vector<8x128xf32>
    %256 = vector.shape_cast %253 : vector<8x128xf32> to vector<1x8x128xf32>
    tpu.vector_store %arg3[%c4_56, %c0_57, %c0_58], %256 {strides = array<i32>} : memref<8x8x128xf32, #tpu.memory_space<vmem>>, vector<1x8x128xf32>,
    %257 = math.rsqrt %252 : vector<8x128xf32>
    %258 = arith.mulf %252, %257 : vector<8x128xf32>
    %259 = arith.mulf %211, %212 : vector<8x128xf32>
    %260 = arith.mulf %259, %257 : vector<8x128xf32>
    %261 = arith.mulf %202, %260 : vector<8x128xf32>
    %262 = math.log %261 : vector<8x128xf32>
    %263 = arith.subf %94, %262 : vector<8x128xf32>
    %264 = arith.mulf %203, %258 : vector<8x128xf32>
    %c6 = arith.constant 6 : index
    %c0_59 = arith.constant 0 : index
    %c0_60 = arith.constant 0 : index
    %265 = vector.load %arg2[%c6, %c0_59, %c0_60] : memref<8x8x128xf32, #tpu.memory_space<vmem>>, vector<1x8x128xf32>
    %266 = vector.shape_cast %265 : vector<1x8x128xf32> to vector<8x128xf32>
    %267 = arith.mulf %266, %213 : vector<8x128xf32>
    %268 = arith.mulf %267, %267 : vector<8x128xf32>
    %cst_61 = arith.constant 1.000000e+00 : f32
    %269 = vector.broadcast %cst_61 : f32 to vector<8x128xf32>
    %270 = arith.subf %269, %268 : vector<8x128xf32>
    %271 = vector.broadcast %1 : f32 to vector<8x128xf32>
    %272 = arith.maximumf %270, %271 : vector<8x128xf32>
    %273 = math.rsqrt %272 : vector<8x128xf32>
    %274 = arith.mulf %213, %273 : vector<8x128xf32>
    %c36 = arith.constant 36 : index
    %275 = memref.load %arg1[%c36] : memref<60xf32, #tpu.memory_space<smem>>
    %276 = vector.broadcast %275 : f32 to vector<8x128xf32>
    %277 = arith.mulf %276, %19 : vector<8x128xf32>
    %c37 = arith.constant 37 : index
    %278 = memref.load %arg1[%c37] : memref<60xf32, #tpu.memory_space<smem>>
    %279 = vector.broadcast %278 : f32 to vector<8x128xf32>
    %280 = arith.mulf %279, %66 : vector<8x128xf32>
    %281 = arith.addf %277, %280 : vector<8x128xf32>
    %c38 = arith.constant 38 : index
    %282 = memref.load %arg1[%c38] : memref<60xf32, #tpu.memory_space<smem>>
    %283 = vector.broadcast %282 : f32 to vector<8x128xf32>
    %284 = arith.mulf %283, %123 : vector<8x128xf32>
    %285 = arith.addf %281, %284 : vector<8x128xf32>
    %c39 = arith.constant 39 : index
    %286 = memref.load %arg1[%c39] : memref<60xf32, #tpu.memory_space<smem>>
    %287 = vector.broadcast %286 : f32 to vector<8x128xf32>
    %288 = arith.mulf %287, %179 : vector<8x128xf32>
    %289 = arith.addf %285, %288 : vector<8x128xf32>
    %c40 = arith.constant 40 : index
    %290 = memref.load %arg1[%c40] : memref<60xf32, #tpu.memory_space<smem>>
    %291 = vector.broadcast %290 : f32 to vector<8x128xf32>
    %292 = arith.mulf %291, %239 : vector<8x128xf32>
    %293 = arith.addf %289, %292 : vector<8x128xf32>
    %c5_62 = arith.constant 5 : index
    %294 = memref.load %arg1[%c5_62] : memref<60xf32, #tpu.memory_space<smem>>
    %295 = vector.broadcast %294 : f32 to vector<8x128xf32>
    %296 = arith.addf %293, %295 : vector<8x128xf32>
    %297 = math.tanh %296 : vector<8x128xf32>
    %cst_63 = arith.constant 4.500000e-01 : f32
    %298 = vector.broadcast %cst_63 : f32 to vector<8x128xf32>
    %299 = arith.mulf %298, %297 : vector<8x128xf32>
    %300 = arith.mulf %267, %267 : vector<8x128xf32>
    %301 = arith.mulf %267, %300 : vector<8x128xf32>
    %302 = arith.subf %267, %301 : vector<8x128xf32>
    %303 = arith.mulf %299, %302 : vector<8x128xf32>
    %304 = arith.addf %267, %303 : vector<8x128xf32>
    %cst_64 = arith.constant 3.000000e+00 : f32
    %305 = vector.broadcast %cst_64 : f32 to vector<8x128xf32>
    %306 = arith.mulf %305, %300 : vector<8x128xf32>
    %cst_65 = arith.constant 1.000000e+00 : f32
    %307 = vector.broadcast %cst_65 : f32 to vector<8x128xf32>
    %308 = arith.subf %307, %306 : vector<8x128xf32>
    %309 = arith.mulf %299, %308 : vector<8x128xf32>
    %cst_66 = arith.constant 1.000000e+00 : f32
    %310 = vector.broadcast %cst_66 : f32 to vector<8x128xf32>
    %311 = arith.addf %310, %309 : vector<8x128xf32>
    %312 = arith.mulf %247, %311 : vector<8x128xf32>
    %313 = arith.mulf %304, %304 : vector<8x128xf32>
    %cst_67 = arith.constant 1.000000e+00 : f32
    %314 = vector.broadcast %cst_67 : f32 to vector<8x128xf32>
    %315 = arith.subf %314, %313 : vector<8x128xf32>
    %316 = vector.broadcast %1 : f32 to vector<8x128xf32>
    %317 = arith.maximumf %315, %316 : vector<8x128xf32>
    %318 = arith.mulf %304, %264 : vector<8x128xf32>
    %c6_68 = arith.constant 6 : index
    %c0_69 = arith.constant 0 : index
    %c0_70 = arith.constant 0 : index
    %319 = vector.load %arg3[%c6_68, %c0_69, %c0_70] : memref<8x8x128xf32, #tpu.memory_space<vmem>>, vector<1x8x128xf32>
    %320 = vector.shape_cast %319 : vector<1x8x128xf32> to vector<8x128xf32>
    %321 = vector.shape_cast %318 : vector<8x128xf32> to vector<1x8x128xf32>
    tpu.vector_store %arg3[%c6_68, %c0_69, %c0_70], %321 {strides = array<i32>} : memref<8x8x128xf32, #tpu.memory_space<vmem>>, vector<1x8x128xf32>,
    %322 = math.sqrt %317 : vector<8x128xf32>
    %323 = arith.mulf %264, %322 : vector<8x128xf32>
    %c2_71 = arith.constant 2 : index
    %c0_72 = arith.constant 0 : index
    %c0_73 = arith.constant 0 : index
    %324 = vector.load %arg2[%c2_71, %c0_72, %c0_73] : memref<8x8x128xf32, #tpu.memory_space<vmem>>, vector<1x8x128xf32>
    %325 = vector.shape_cast %324 : vector<1x8x128xf32> to vector<8x128xf32>
    %326 = arith.mulf %325, %274 : vector<8x128xf32>
    %c7 = arith.constant 7 : index
    %c0_74 = arith.constant 0 : index
    %c0_75 = arith.constant 0 : index
    %327 = vector.load %arg2[%c7, %c0_74, %c0_75] : memref<8x8x128xf32, #tpu.memory_space<vmem>>, vector<1x8x128xf32>
    %328 = vector.shape_cast %327 : vector<1x8x128xf32> to vector<8x128xf32>
    %329 = arith.mulf %328, %274 : vector<8x128xf32>
    %c42 = arith.constant 42 : index
    %330 = memref.load %arg1[%c42] : memref<60xf32, #tpu.memory_space<smem>>
    %331 = vector.broadcast %330 : f32 to vector<8x128xf32>
    %332 = arith.mulf %331, %19 : vector<8x128xf32>
    %c48 = arith.constant 48 : index
    %333 = memref.load %arg1[%c48] : memref<60xf32, #tpu.memory_space<smem>>
    %334 = vector.broadcast %333 : f32 to vector<8x128xf32>
    %335 = arith.mulf %334, %19 : vector<8x128xf32>
    %c43 = arith.constant 43 : index
    %336 = memref.load %arg1[%c43] : memref<60xf32, #tpu.memory_space<smem>>
    %337 = vector.broadcast %336 : f32 to vector<8x128xf32>
    %338 = arith.mulf %337, %66 : vector<8x128xf32>
    %339 = arith.addf %332, %338 : vector<8x128xf32>
    %c49 = arith.constant 49 : index
    %340 = memref.load %arg1[%c49] : memref<60xf32, #tpu.memory_space<smem>>
    %341 = vector.broadcast %340 : f32 to vector<8x128xf32>
    %342 = arith.mulf %341, %66 : vector<8x128xf32>
    %343 = arith.addf %335, %342 : vector<8x128xf32>
    %c44 = arith.constant 44 : index
    %344 = memref.load %arg1[%c44] : memref<60xf32, #tpu.memory_space<smem>>
    %345 = vector.broadcast %344 : f32 to vector<8x128xf32>
    %346 = arith.mulf %345, %123 : vector<8x128xf32>
    %347 = arith.addf %339, %346 : vector<8x128xf32>
    %c50 = arith.constant 50 : index
    %348 = memref.load %arg1[%c50] : memref<60xf32, #tpu.memory_space<smem>>
    %349 = vector.broadcast %348 : f32 to vector<8x128xf32>
    %350 = arith.mulf %349, %123 : vector<8x128xf32>
    %351 = arith.addf %343, %350 : vector<8x128xf32>
    %c45 = arith.constant 45 : index
    %352 = memref.load %arg1[%c45] : memref<60xf32, #tpu.memory_space<smem>>
    %353 = vector.broadcast %352 : f32 to vector<8x128xf32>
    %354 = arith.mulf %353, %179 : vector<8x128xf32>
    %355 = arith.addf %347, %354 : vector<8x128xf32>
    %c51 = arith.constant 51 : index
    %356 = memref.load %arg1[%c51] : memref<60xf32, #tpu.memory_space<smem>>
    %357 = vector.broadcast %356 : f32 to vector<8x128xf32>
    %358 = arith.mulf %357, %179 : vector<8x128xf32>
    %359 = arith.addf %351, %358 : vector<8x128xf32>
    %c46 = arith.constant 46 : index
    %360 = memref.load %arg1[%c46] : memref<60xf32, #tpu.memory_space<smem>>
    %361 = vector.broadcast %360 : f32 to vector<8x128xf32>
    %362 = arith.mulf %361, %239 : vector<8x128xf32>
    %363 = arith.addf %355, %362 : vector<8x128xf32>
    %c52 = arith.constant 52 : index
    %364 = memref.load %arg1[%c52] : memref<60xf32, #tpu.memory_space<smem>>
    %365 = vector.broadcast %364 : f32 to vector<8x128xf32>
    %366 = arith.mulf %365, %239 : vector<8x128xf32>
    %367 = arith.addf %359, %366 : vector<8x128xf32>
    %c47 = arith.constant 47 : index
    %368 = memref.load %arg1[%c47] : memref<60xf32, #tpu.memory_space<smem>>
    %369 = vector.broadcast %368 : f32 to vector<8x128xf32>
    %370 = arith.mulf %369, %304 : vector<8x128xf32>
    %371 = arith.addf %363, %370 : vector<8x128xf32>
    %c53 = arith.constant 53 : index
    %372 = memref.load %arg1[%c53] : memref<60xf32, #tpu.memory_space<smem>>
    %373 = vector.broadcast %372 : f32 to vector<8x128xf32>
    %374 = arith.mulf %373, %304 : vector<8x128xf32>
    %375 = arith.addf %367, %374 : vector<8x128xf32>
    %c54 = arith.constant 54 : index
    %376 = memref.load %arg1[%c54] : memref<60xf32, #tpu.memory_space<smem>>
    %377 = vector.broadcast %376 : f32 to vector<8x128xf32>
    %378 = arith.addf %371, %377 : vector<8x128xf32>
    %c55 = arith.constant 55 : index
    %379 = memref.load %arg1[%c55] : memref<60xf32, #tpu.memory_space<smem>>
    %380 = vector.broadcast %379 : f32 to vector<8x128xf32>
    %381 = arith.addf %375, %380 : vector<8x128xf32>
    %382 = math.tanh %378 : vector<8x128xf32>
    %cst_76 = arith.constant 6.000000e-01 : f32
    %383 = vector.broadcast %cst_76 : f32 to vector<8x128xf32>
    %384 = arith.mulf %383, %382 : vector<8x128xf32>
    %385 = math.tanh %381 : vector<8x128xf32>
    %cst_77 = arith.constant 6.000000e-01 : f32
    %386 = vector.broadcast %cst_77 : f32 to vector<8x128xf32>
    %387 = arith.mulf %386, %385 : vector<8x128xf32>
    %388 = arith.mulf %326, %326 : vector<8x128xf32>
    %389 = arith.mulf %329, %329 : vector<8x128xf32>
    %390 = arith.addf %388, %389 : vector<8x128xf32>
    %391 = math.rsqrt %390 : vector<8x128xf32>
    %392 = arith.mulf %326, %391 : vector<8x128xf32>
    %393 = arith.mulf %329, %391 : vector<8x128xf32>
    %394 = arith.mulf %384, %392 : vector<8x128xf32>
    %cst_78 = arith.constant 1.000000e+00 : f32
    %395 = vector.broadcast %cst_78 : f32 to vector<8x128xf32>
    %396 = arith.subf %395, %394 : vector<8x128xf32>
    %397 = arith.mulf %387, %393 : vector<8x128xf32>
    %398 = arith.subf %396, %397 : vector<8x128xf32>
    %399 = arith.mulf %384, %393 : vector<8x128xf32>
    %400 = arith.mulf %387, %392 : vector<8x128xf32>
    %401 = arith.subf %399, %400 : vector<8x128xf32>
    %402 = arith.mulf %398, %398 : vector<8x128xf32>
    %403 = arith.mulf %401, %401 : vector<8x128xf32>
    %404 = arith.addf %402, %403 : vector<8x128xf32>
    %cst_79 = arith.constant 1.000000e+00 : f32
    %405 = vector.broadcast %cst_79 : f32 to vector<8x128xf32>
    %406 = arith.divf %405, %404 : vector<8x128xf32>
    %407 = arith.subf %392, %384 : vector<8x128xf32>
    %408 = arith.subf %393, %387 : vector<8x128xf32>
    %409 = arith.mulf %407, %398 : vector<8x128xf32>
    %410 = arith.mulf %408, %401 : vector<8x128xf32>
    %411 = arith.subf %409, %410 : vector<8x128xf32>
    %412 = arith.mulf %411, %406 : vector<8x128xf32>
    %413 = arith.mulf %407, %401 : vector<8x128xf32>
    %414 = arith.mulf %408, %398 : vector<8x128xf32>
    %415 = arith.addf %413, %414 : vector<8x128xf32>
    %416 = arith.mulf %415, %406 : vector<8x128xf32>
    %417 = arith.mulf %384, %384 : vector<8x128xf32>
    %cst_80 = arith.constant 1.000000e+00 : f32
    %418 = vector.broadcast %cst_80 : f32 to vector<8x128xf32>
    %419 = arith.subf %418, %417 : vector<8x128xf32>
    %420 = arith.mulf %387, %387 : vector<8x128xf32>
    %421 = arith.subf %419, %420 : vector<8x128xf32>
    %422 = arith.mulf %421, %406 : vector<8x128xf32>
    %423 = arith.mulf %312, %422 : vector<8x128xf32>
    %c56 = arith.constant 56 : index
    %424 = memref.load %arg1[%c56] : memref<60xf32, #tpu.memory_space<smem>>
    %c57 = arith.constant 57 : index
    %425 = memref.load %arg1[%c57] : memref<60xf32, #tpu.memory_space<smem>>
    %426 = vector.broadcast %424 : f32 to vector<8x128xf32>
    %427 = arith.mulf %426, %412 : vector<8x128xf32>
    %428 = vector.broadcast %425 : f32 to vector<8x128xf32>
    %429 = arith.mulf %428, %416 : vector<8x128xf32>
    %430 = arith.subf %427, %429 : vector<8x128xf32>
    %431 = vector.broadcast %425 : f32 to vector<8x128xf32>
    %432 = arith.mulf %431, %412 : vector<8x128xf32>
    %433 = vector.broadcast %424 : f32 to vector<8x128xf32>
    %434 = arith.mulf %433, %416 : vector<8x128xf32>
    %435 = arith.addf %432, %434 : vector<8x128xf32>
    %436 = arith.mulf %430, %323 : vector<8x128xf32>
    %c2_81 = arith.constant 2 : index
    %c0_82 = arith.constant 0 : index
    %c0_83 = arith.constant 0 : index
    %437 = vector.load %arg3[%c2_81, %c0_82, %c0_83] : memref<8x8x128xf32, #tpu.memory_space<vmem>>, vector<1x8x128xf32>
    %438 = vector.shape_cast %437 : vector<1x8x128xf32> to vector<8x128xf32>
    %439 = vector.shape_cast %436 : vector<8x128xf32> to vector<1x8x128xf32>
    tpu.vector_store %arg3[%c2_81, %c0_82, %c0_83], %439 {strides = array<i32>} : memref<8x8x128xf32, #tpu.memory_space<vmem>>, vector<1x8x128xf32>,
    %440 = arith.mulf %435, %323 : vector<8x128xf32>
    %c7_84 = arith.constant 7 : index
    %c0_85 = arith.constant 0 : index
    %c0_86 = arith.constant 0 : index
    %441 = vector.load %arg3[%c7_84, %c0_85, %c0_86] : memref<8x8x128xf32, #tpu.memory_space<vmem>>, vector<1x8x128xf32>
    %442 = vector.shape_cast %441 : vector<1x8x128xf32> to vector<8x128xf32>
    %443 = vector.shape_cast %440 : vector<8x128xf32> to vector<1x8x128xf32>
    tpu.vector_store %arg3[%c7_84, %c0_85, %c0_86], %443 {strides = array<i32>} : memref<8x8x128xf32, #tpu.memory_space<vmem>>, vector<1x8x128xf32>,
    %444 = math.log %423 : vector<8x128xf32>
    %445 = arith.addf %263, %444 : vector<8x128xf32>
    %c0_87 = arith.constant 0 : index
    %c0_88 = arith.constant 0 : index
    %446 = vector.load %arg4[%c0_87, %c0_88] : memref<8x128xf32, #tpu.memory_space<vmem>>, vector<8x128xf32>
    tpu.vector_store %arg4[%c0_87, %c0_88], %445 {strides = array<i32>} : memref<8x128xf32, #tpu.memory_space<vmem>>, vector<8x128xf32>,
    return
  }
  func.func @transform_0(%arg0: i32) -> i32 {
    %c0_i32 = arith.constant 0 : i32
    %c0_i32_0 = arith.constant 0 : i32
    return %c0_i32 : i32
  }
  func.func @transform_1(%arg0: i32) -> (i32, i32, i32) {
    %c0_i32 = arith.constant 0 : i32
    %c0_i32_0 = arith.constant 0 : i32
    %c0_i32_1 = arith.constant 0 : i32
    return %c0_i32, %arg0, %c0_i32_0 : i32, i32, i32
  }
  func.func @transform_2(%arg0: i32) -> (i32, i32, i32) {
    %c0_i32 = arith.constant 0 : i32
    %c0_i32_0 = arith.constant 0 : i32
    %c0_i32_1 = arith.constant 0 : i32
    return %c0_i32, %arg0, %c0_i32_0 : i32, i32, i32
  }
  func.func @transform_3(%arg0: i32) -> (i32, i32) {
    %c0_i32 = arith.constant 0 : i32
    %c0_i32_0 = arith.constant 0 : i32
    return %arg0, %c0_i32 : i32, i32
  }
}

</mosaic_0001>

<llo_original>
// kernel: recursive_flow_sd_forward.1
$region0: #{recursive_flow_sd_forward.1}
  #allocation0 [shape = 'u32[]', space=smem, size = 0x4, offset = 0x4, fixed_abs, tag = 'smem constant byte address 0x4 - core index']
  #allocation1 [shape = 'u32[72,128]{1,0:T(1,128)}', space=vmem, size = 0x9000, scoped, tag = 'internal scratch']
  %s0 = inlined_call_operand.vmem [shape: f32[60], index: 0, kind: input, shape index: {}]
  %s1 = inlined_call_operand.vmem [shape: f32[8,16,128], index: 1, kind: input, shape index: {}]
  %s2 = inlined_call_operand.vmem [shape: f32[8,16,128], index: 2, kind: output, shape index: {0}]
  %s3 = inlined_call_operand.hbm [shape: f32[16,128], index: 3, kind: output, shape index: {1}]
  %4 = xla_tuple %s2, %s3
  %s5 = sld [smem:[#allocation0]]
  $region125: #{recursive_flow_sd_forward.1} parent=0
    _
  %s7 = ssub.s32 1, %s5
  %s8 = scalar_select 0, %s7, %s5
  $region1: #{recursive_flow_sd_forward.1} parent=0
    #allocation2 [shape = 'u8[512]{0}', space=smem, size = 0x200, scoped, tag = 'input window, operand 0, single buffered']
    #allocation3 [shape = 's32[2]{0}', space=sflag, size = 0x8, scoped, tag = 'scoped memory for recursive_flow_sd_forward.1']
    #allocation4 [shape = 's32[2]{0}', space=sflag, size = 0x8, scoped, tag = 'scoped memory for recursive_flow_sd_forward.1']
    #allocation5 [shape = 'u8[65536]{0}', space=vmem, size = 0x10000, scoped, tag = 'input window, operand 1']
    #allocation6 [shape = 'u8[65536]{0}', space=vmem, size = 0x10000, scoped, tag = 'output window, operand 0']
    #allocation7 [shape = 'u8[8192]{0}', space=vmem, size = 0x2000, scoped, tag = 'output window, operand 1']
    %9 = vsyncpa [#allocation4], 0
    %10 = vsyncpa [#allocation3], 0
    %s11 = scalar_lea.sflag [#allocation3], 1
    %12 = vsyncpa %s11, 0
    loop: start=0, step=1, limit=4
    $region2: #{recursive_flow_sd_forward.1} parent=1 // loop_pre_header
      _
    $region3: #{recursive_flow_sd_forward.1} parent=1 // loop_header
      %s14 = sphi 0, %s18
      %p15 = scmp.ge.s32.totalorder %s14, 4
      %s22 = sphi 0, %s22
      %s24 = sphi 0, %s22
      %s25 = sphi 0, %s24
      %s39 = sphi 0, %s25
      %s45 = sphi 0, %s47
      %s48 = sphi 0, %s45
      %s49 = sphi 0, %s48
      %s65 = sphi 0, %s49
      %s71 = sphi 0, %s73
      %s74 = sphi 0, %s71
      %s75 = sphi 0, %s74
      %s91 = sphi 0, %s75
      %s97 = sphi 0, %s99
      %s100 = sphi 0, %s97
      %s101 = sphi 0, %s100
      %s117 = sphi 0, %s101
    $region4: #{recursive_flow_sd_forward.1} parent=1 // loop_header_branch
      %17 = sbr.rel (%p15) target = $region8
    $region5: #{recursive_flow_sd_forward.1} parent=1 // loop_body
      %s19 = ssub.s32 %s14, 1
      %s20 = ssub.s32 %s14, 2
      %s21 = sadd.s32 %s14, 1
      %s23 = sadd.s32 %s22, 1
      %p26 = scmp.eq.s32.totalorder %s14, 1
      %p27 = scmp.ne.s32.totalorder %s22, %s24
      %p28 = scmp.eq.s32.totalorder %s14, 0
      %p29 = por %p27, %p28
      %p30 = scmp.ne.s32.totalorder %s22, %s24
      %p31 = scmp.eq.s32.totalorder %s19, 1
      %p32 = por %p30, %p31
      %p33 = scmp.ne.s32.totalorder %s24, %s25
      %p34 = scmp.eq.s32.totalorder %s19, 0
      %p35 = por %p33, %p34
      %p36 = scmp.ne.s32.totalorder %s24, %s25
      %p37 = scmp.eq.s32.totalorder %s20, 1
      %p38 = por %p36, %p37
      %p40 = scmp.ne.s32.totalorder %s25, %s39
      %p41 = scmp.eq.s32.totalorder %s20, 0
      %p42 = por %p40, %p41
      %s43 = ssub.s32 %s14, %s21
      %p44 = scmp.eq.s32.totalorder %s43, 0
      %s46 = sadd.s32 %s45, 1
      %s47 = scalar_select %p44, %s45, %s46
      %p50 = pneg %p44
      %p51 = scmp.eq.s32.totalorder %s14, 1
      %p52 = por %p50, %p51
      %p53 = scmp.ne.s32.totalorder %s45, %s48
      %p54 = scmp.eq.s32.totalorder %s14, 0
      %p55 = por %p53, %p54
      %p56 = scmp.ne.s32.totalorder %s45, %s48
      %p57 = scmp.eq.s32.totalorder %s19, 1
      %p58 = por %p56, %p57
      %p59 = scmp.ne.s32.totalorder %s48, %s49
      %p60 = scmp.eq.s32.totalorder %s19, 0
      %p61 = por %p59, %p60
      %p62 = scmp.ne.s32.totalorder %s48, %s49
      %p63 = scmp.eq.s32.totalorder %s20, 1
      %p64 = por %p62, %p63
      %p66 = scmp.ne.s32.totalorder %s49, %s65
      %p67 = scmp.eq.s32.totalorder %s20, 0
      %p68 = por %p66, %p67
      %s69 = ssub.s32 %s14, %s21
      %p70 = scmp.eq.s32.totalorder %s69, 0
      %s72 = sadd.s32 %s71, 1
      %s73 = scalar_select %p70, %s71, %s72
      %p76 = pneg %p70
      %p77 = scmp.eq.s32.totalorder %s14, 1
      %p78 = por %p76, %p77
      %p79 = scmp.ne.s32.totalorder %s71, %s74
      %p80 = scmp.eq.s32.totalorder %s14, 0
      %p81 = por %p79, %p80
      %p82 = scmp.ne.s32.totalorder %s71, %s74
      %p83 = scmp.eq.s32.totalorder %s19, 1
      %p84 = por %p82, %p83
      %p85 = scmp.ne.s32.totalorder %s74, %s75
      %p86 = scmp.eq.s32.totalorder %s19, 0
      %p87 = por %p85, %p86
      %p88 = scmp.ne.s32.totalorder %s74, %s75
      %p89 = scmp.eq.s32.totalorder %s20, 1
      %p90 = por %p88, %p89
      %p92 = scmp.ne.s32.totalorder %s75, %s91
      %p93 = scmp.eq.s32.totalorder %s20, 0
      %p94 = por %p92, %p93
      %s95 = ssub.s32 %s14, %s21
      %p96 = scmp.eq.s32.totalorder %s95, 0
      %s98 = sadd.s32 %s97, 1
      %s99 = scalar_select %p96, %s97, %s98
      %p102 = pneg %p96
      %p103 = scmp.eq.s32.totalorder %s14, 1
      %p104 = por %p102, %p103
      %p105 = scmp.ne.s32.totalorder %s97, %s100
      %p106 = scmp.eq.s32.totalorder %s14, 0
      %p107 = por %p105, %p106
      %p108 = scmp.ne.s32.totalorder %s97, %s100
      %p109 = scmp.eq.s32.totalorder %s19, 1
      %p110 = por %p108, %p109
      %p111 = scmp.ne.s32.totalorder %s100, %s101
      %p112 = scmp.eq.s32.totalorder %s19, 0
      %p113 = por %p111, %p112
      %p114 = scmp.ne.s32.totalorder %s100, %s101
      %p115 = scmp.eq.s32.totalorder %s20, 1
      %p116 = por %p114, %p115
      %p118 = scmp.ne.s32.totalorder %s101, %s117
      %p119 = scmp.eq.s32.totalorder %s20, 0
      %p120 = por %p118, %p119
      %p121 = scmp.le.s32.totalorder 1, %s14
      %p122 = scmp.lt.s32.totalorder %s14, 3
      %p123 = pnand %p121, %p122
      %p124 = pneg %p123
      // Predicated region
      $region9: #{recursive_flow_sd_forward.1} parent=5 // pred_check
        _
      $region10: #{recursive_flow_sd_forward.1} parent=5 // pred_check_branch
        %126 = sbr.rel (%p123) target = $region12
      $region11: #{recursive_flow_sd_forward.1} parent=5 // pred_region
        %s127 = ssub.s32 %s14, 1
        // Predicated region
        $region13: #{recursive_flow_sd_forward.1} parent=11 // pred_check
          %p128 = pneg %p35
        $region14: #{recursive_flow_sd_forward.1} parent=11 // pred_check_branch
          %130 = sbr.rel (%p128) target = $region16
        $region15: #{recursive_flow_sd_forward.1} parent=11 // pred_region
          %132 = vsyncadd [#allocation4], 0
          %s134 = sshll.u32 %s0, 4
          %s135 = int_to_ptr.vmem [resolvable:$true] %s134
          %137 = dma.vmem_to_smem %s135, 16, [#allocation2], [#allocation4]
        $region16: #{recursive_flow_sd_forward.1} parent=11 // pred_fallthru
          _
      $region12: #{recursive_flow_sd_forward.1} parent=5 // pred_fallthru
        _
      %p138 = scmp.lt.s32.totalorder %s14, 2
      // Predicated region
      $region17: #{recursive_flow_sd_forward.1} parent=5 // pred_check
        %p139 = pneg %p138
      $region18: #{recursive_flow_sd_forward.1} parent=5 // pred_check_branch
        %141 = sbr.rel (%p139) target = $region20
      $region19: #{recursive_flow_sd_forward.1} parent=5 // pred_region
        // Predicated region
        $region21: #{recursive_flow_sd_forward.1} parent=19 // pred_check
          %p142 = pneg %p55
        $region22: #{recursive_flow_sd_forward.1} parent=19 // pred_check_branch
          %144 = sbr.rel (%p142) target = $region24
        $region23: #{recursive_flow_sd_forward.1} parent=19 // pred_region
          %s145 = sand.u32 %s45, 1
          %s146 = sand.u32 %s45, 1
          %s147 = smul.addr %s146, 64
          %s148 = scalar_lea.vmem [#allocation5], %s147
          %s149 = smul.addr %s14, 8
          %s150 = scalar_lea.vmem %s1, %s149
          // Predicated region
          $region25: #{recursive_flow_sd_forward.1} parent=23 // pred_check
            _
          $region26: #{recursive_flow_sd_forward.1} parent=23 // pred_check_branch
            %152 = sbr.rel (0) target = $region28
          $region27: #{recursive_flow_sd_forward.1} parent=23 // pred_region
            // Predicated region
            $region29: #{recursive_flow_sd_forward.1} parent=27 // pred_check
              _
            $region30: #{recursive_flow_sd_forward.1} parent=27 // pred_check_branch
              %154 = sbr.rel (0) target = $region32
            $region31: #{recursive_flow_sd_forward.1} parent=27 // pred_region
              // Predicated region
              $region44: #{recursive_flow_sd_forward.1} parent=31 // pred_check
                _
              $region45: #{recursive_flow_sd_forward.1} parent=31 // pred_check_branch
                %184 = sbr.rel (0) target = $region47
              $region46: #{recursive_flow_sd_forward.1} parent=31 // pred_region
                loop: start=0, step=1, limit=1
                $region48: #{recursive_flow_sd_forward.1} parent=46 // loop_pre_header
                  _
                $region49: #{recursive_flow_sd_forward.1} parent=46 // loop_header
                  %s186 = sphi 0, %s190
                  %p187 = scmp.ge.s32.totalorder %s186, 1
                  %s191 = sphi %s150, %s150
                  %s192 = sphi %s148, %s148
                $region50: #{recursive_flow_sd_forward.1} parent=46 // loop_header_branch
                  %189 = sbr.rel (%p187) target = $region54
                $region51: #{recursive_flow_sd_forward.1} parent=46 // loop_body
                  %v193 = vld [vmem:[%s191] sm:$0xff]
                  %194 = vst [vmem:[%s192] sm:$0xff] %v193
                  %v195 = vld [vmem:[%s191 + $0x10] sm:$0xff]
                  %196 = vst [vmem:[%s192 + $0x8] sm:$0xff] %v195
                  %v197 = vld [vmem:[%s191 + $0x20] sm:$0xff]
                  %198 = vst [vmem:[%s192 + $0x10] sm:$0xff] %v197
                  %v199 = vld [vmem:[%s191 + $0x30] sm:$0xff]
                  %200 = vst [vmem:[%s192 + $0x18] sm:$0xff] %v199
                  %v201 = vld [vmem:[%s191 + $0x40] sm:$0xff]
                  %202 = vst [vmem:[%s192 + $0x20] sm:$0xff] %v201
                  %v203 = vld [vmem:[%s191 + $0x50] sm:$0xff]
                  %204 = vst [vmem:[%s192 + $0x28] sm:$0xff] %v203
                  %v205 = vld [vmem:[%s191 + $0x60] sm:$0xff]
                  %206 = vst [vmem:[%s192 + $0x30] sm:$0xff] %v205
                  %v207 = vld [vmem:[%s191 + $0x70] sm:$0xff]
                  %208 = vst [vmem:[%s192 + $0x38] sm:$0xff] %v207
                $region52: #{recursive_flow_sd_forward.1} parent=46 // loop_footer
                  %s190 = sadd.s32 1, %s186
                $region53: #{recursive_flow_sd_forward.1} parent=46 // loop_footer_branch
                  %185 = sbr.rel target = $region49
                $region54: #{recursive_flow_sd_forward.1} parent=46 // loop_exit
                  _
              $region47: #{recursive_flow_sd_forward.1} parent=31 // pred_fallthru
                _
              // Predicated region
              $region55: #{recursive_flow_sd_forward.1} parent=31 // pred_check
                _
              $region56: #{recursive_flow_sd_forward.1} parent=31 // pred_check_branch
                %210 = sbr.rel target = $region58
              $region57: #{recursive_flow_sd_forward.1} parent=31 // pred_region
                _
              $region58: #{recursive_flow_sd_forward.1} parent=31 // pred_fallthru
                _
            $region32: #{recursive_flow_sd_forward.1} parent=27 // pred_fallthru
              _
            // Predicated region
            $region33: #{recursive_flow_sd_forward.1} parent=27 // pred_check
              _
            $region34: #{recursive_flow_sd_forward.1} parent=27 // pred_check_branch
              %156 = sbr.rel target = $region36
            $region35: #{recursive_flow_sd_forward.1} parent=27 // pred_region
              %s158 = ssub.s32 256, 1
              loop: start=0, step=1, limit=1
              $region37: #{recursive_flow_sd_forward.1} parent=35 // loop_pre_header
                _
              $region38: #{recursive_flow_sd_forward.1} parent=35 // loop_header
                %s160 = sphi 0, %s164
                %p161 = scmp.ge.s32.totalorder %s160, 1
                %s165 = sphi %s150, %s150
                %s166 = sphi %s148, %s148
              $region39: #{recursive_flow_sd_forward.1} parent=35 // loop_header_branch
                %163 = sbr.rel (%p161) target = $region43
              $region40: #{recursive_flow_sd_forward.1} parent=35 // loop_body
                %v167 = vld [vmem:[%s165] sm:%s158]
                %168 = vst [vmem:[%s166] sm:%s158] %v167
                %v169 = vld [vmem:[%s165 + $0x10] sm:%s158]
                %170 = vst [vmem:[%s166 + $0x8] sm:%s158] %v169
                %v171 = vld [vmem:[%s165 + $0x20] sm:%s158]
                %172 = vst [vmem:[%s166 + $0x10] sm:%s158] %v171
                %v173 = vld [vmem:[%s165 + $0x30] sm:%s158]
                %174 = vst [vmem:[%s166 + $0x18] sm:%s158] %v173
                %v175 = vld [vmem:[%s165 + $0x40] sm:%s158]
                %176 = vst [vmem:[%s166 + $0x20] sm:%s158] %v175
                %v177 = vld [vmem:[%s165 + $0x50] sm:%s158]
                %178 = vst [vmem:[%s166 + $0x28] sm:%s158] %v177
                %v179 = vld [vmem:[%s165 + $0x60] sm:%s158]
                %180 = vst [vmem:[%s166 + $0x30] sm:%s158] %v179
                %v181 = vld [vmem:[%s165 + $0x70] sm:%s158]
                %182 = vst [vmem:[%s166 + $0x38] sm:%s158] %v181
              $region41: #{recursive_flow_sd_forward.1} parent=35 // loop_footer
                %s164 = sadd.s32 1, %s160
              $region42: #{recursive_flow_sd_forward.1} parent=35 // loop_footer_branch
                %159 = sbr.rel target = $region38
              $region43: #{recursive_flow_sd_forward.1} parent=35 // loop_exit
                _
            $region36: #{recursive_flow_sd_forward.1} parent=27 // pred_fallthru
              _
          $region28: #{recursive_flow_sd_forward.1} parent=23 // pred_fallthru
            _
          %211 = vnop
        $region24: #{recursive_flow_sd_forward.1} parent=19 // pred_fallthru
          _
      $region20: #{recursive_flow_sd_forward.1} parent=5 // pred_fallthru
        _
      %p212 = scmp.le.s32.totalorder 1, %s14
      %p213 = scmp.lt.s32.totalorder %s14, 3
      %p214 = pnand %p212, %p213
      %p215 = pneg %p214
      // Predicated region
      $region59: #{recursive_flow_sd_forward.1} parent=5 // pred_check
        _
      $region60: #{recursive_flow_sd_forward.1} parent=5 // pred_check_branch
        %217 = sbr.rel (%p214) target = $region62
      $region61: #{recursive_flow_sd_forward.1} parent=5 // pred_region
        %s218 = ssub.s32 %s14, 1
        // Predicated region
        $region63: #{recursive_flow_sd_forward.1} parent=61 // pred_check
          %p219 = pneg %p35
        $region64: #{recursive_flow_sd_forward.1} parent=61 // pred_check_branch
          %221 = sbr.rel (%p219) target = $region66
        $region65: #{recursive_flow_sd_forward.1} parent=61 // pred_region
          %223 = dma.done [#allocation4], 16
        $region66: #{recursive_flow_sd_forward.1} parent=61 // pred_fallthru
          _
        %s224 = sand.u32 %s48, 1
        %s225 = sand.u32 %s48, 1
        %s226 = smul.addr %s225, 64
        %s227 = scalar_lea.vmem [#allocation5], %s226
        // Predicated region
        $region67: #{recursive_flow_sd_forward.1} parent=61 // pred_check
          %p228 = pneg %p61
        $region68: #{recursive_flow_sd_forward.1} parent=61 // pred_check_branch
          %230 = sbr.rel (%p228) target = $region70
        $region69: #{recursive_flow_sd_forward.1} parent=61 // pred_region
          _
        $region70: #{recursive_flow_sd_forward.1} parent=61 // pred_fallthru
          _
        %231 = sfence
        %p232 = pneg %p35
        %p233 = pneg %p32
        %s234 = sand.u32 %s48, 1
        %s235 = sand.u32 %s48, 1
        %s236 = smul.addr %s235, 64
        %s237 = scalar_lea.vmem [#allocation5], %s236
        %p238 = pneg %p61
        %p239 = pneg %p58
        %p240 = pneg %p87
        %p241 = pneg %p84
        %s242 = sand.u32 %s74, 1
        %s243 = sand.u32 %s74, 1
        %s244 = smul.addr %s243, 64
        %s245 = scalar_lea.vmem [#allocation6], %s244
        %p246 = pneg %p113
        %p247 = pneg %p110
        %s248 = sand.u32 %s100, 1
        %s249 = scalar_lea.sflag [#allocation3], %s248
        %s250 = sand.u32 %s100, 1
        %s251 = smul.addr %s250, 8
        %s252 = scalar_lea.vmem [#allocation7], %s251
        %s253 = sld [smem:[#allocation2 + $0x3b]]
        %s254 = smul.f32 %s253, %s253
        %v255 = vld [vmem:[%s227] sm:$0xff]
        %v256 = vmul.f32 %v255, %v255
        %v257 = vsub.f32 1.0, %v256
        %v258 = vstv %s254
        %v259 = vmax.f32 %v257, %v258
        %v260 = vrsqrt.pop %v259
        %v261 = vmul.f32 %v260, %v259
        %v262 = vmul.f32 %v261, %v260
        %v263 = vmul.f32 0.5, %v262
        %v264 = vsub.f32 1.5, %v263
        %v265 = vmul.f32 %v260, %v264
        %vm266 = vweird.f32 %v259
        %vm267 = vweird.f32 %v260
        %vm268 = vmor %vm266, %vm267
        %v269 = vsel %vm268, %v260, %v265
        %s270 = sld [smem:[#allocation2]]
        %v271 = vstv %s270
        %v272 = vtanh.pop %v271
        %v273 = vmul.f32 %v272, 0.45
        %v274 = vmul.f32 %v255, %v256
        %v275 = vsub.f32 %v255, %v274
        %v276 = vmul.f32 %v273, %v275
        %v277 = vadd.f32 %v255, %v276
        %v278 = vmul.f32 %v256, 3.0
        %v279 = vsub.f32 1.0, %v278
        %v280 = vmul.f32 %v273, %v279
        %v281 = vadd.f32 %v280, 1.0
        %v282 = vmul.f32 %v277, %v277
        %v283 = vsub.f32 1.0, %v282
        %v284 = vmax.f32 %v283, %v258
        %285 = vst [vmem:[%s245] sm:$0xff] %v277
        %v286 = vrsqrt.pop %v284
        %v287 = vmul.f32 %v286, %v284
        %v288 = vmul.f32 %v287, %v286
        %v289 = vmul.f32 0.5, %v288
        %v290 = vsub.f32 1.5, %v289
        %v291 = vmul.f32 %v286, %v290
        %vm292 = vweird.f32 %v284
        %vm293 = vweird.f32 %v286
        %vm294 = vmor %vm292, %vm293
        %v295 = vsel %vm294, %v286, %v291
        %v296 = vmul.f32 %v284, %v295
        %v297 = vmul.f32 %v259, %v269
        %v298 = vmul.f32 %v297, %v295
        %v299 = vmul.f32 %v298, %v298
        %v300 = vmul.f32 %v299, %v298
        %v301 = vmul.f32 %v300, %v298
        %v302 = vmul.f32 %v301, %v298
        %s303 = scalar_lea.vmem %s227, 24 [#allocation5]
        %v304 = vld [vmem:[%s303] sm:$0xff]
        %v305 = vmul.f32 %v304, %v269
        %v306 = vmul.f32 %v305, %v305
        %v307 = vsub.f32 1.0, %v306
        %v308 = vmax.f32 %v307, %v258
        %v309 = vrsqrt.pop %v308
        %v310 = vmul.f32 %v309, %v308
        %v311 = vmul.f32 %v310, %v309
        %v312 = vmul.f32 0.5, %v311
        %v313 = vsub.f32 1.5, %v312
        %v314 = vmul.f32 %v309, %v313
        %vm315 = vweird.f32 %v308
        %vm316 = vweird.f32 %v309
        %vm317 = vmor %vm315, %vm316
        %v318 = vsel %vm317, %v309, %v314
        %v319 = vmul.f32 %v269, %v318
        %s320 = sld [smem:[#allocation2 + $0xc]]
        %v321 = vstv %s320
        %v322 = vmul.f32 %v321, %v277
        %s323 = sld [smem:[#allocation2 + $0x1]]
        %v324 = vstv %s323
        %v325 = vadd.f32 %v322, %v324
        %v326 = vtanh.pop %v325
        %v327 = vmul.f32 %v326, 0.45
        %v328 = vmul.f32 %v305, %v306
        %v329 = vsub.f32 %v305, %v328
        %v330 = vmul.f32 %v327, %v329
        %v331 = vadd.f32 %v305, %v330
        %v332 = vmul.f32 %v306, 3.0
        %v333 = vsub.f32 1.0, %v332
        %v334 = vmul.f32 %v327, %v333
        %v335 = vadd.f32 %v334, 1.0
        %v336 = vmul.f32 %v281, %v335
        %v337 = vmul.f32 %v331, %v331
        %v338 = vsub.f32 1.0, %v337
        %v339 = vmax.f32 %v338, %v258
        %v340 = vmul.f32 %v331, %v296
        %s341 = scalar_lea.vmem %s245, 24 [#allocation6]
        %342 = vst [vmem:[%s341] sm:$0xff] %v340
        %v343 = vrsqrt.pop %v339
        %v344 = vmul.f32 %v343, %v339
        %v345 = vmul.f32 %v344, %v343
        %v346 = vmul.f32 0.5, %v345
        %v347 = vsub.f32 1.5, %v346
        %v348 = vmul.f32 %v343, %v347
        %vm349 = vweird.f32 %v339
        %vm350 = vweird.f32 %v343
        %vm351 = vmor %vm349, %vm350
        %v352 = vsel %vm351, %v343, %v348
        %v353 = vmul.f32 %v339, %v352
        %v354 = vmul.f32 %v308, %v318
        %v355 = vmul.f32 %v354, %v352
        %v356 = vmul.f32 %v355, %v355
        %v357 = vmul.f32 %v356, %v355
        %v358 = vmul.f32 %v357, %v355
        %v359 = vmul.f32 %v302, %v358
        %v360 = vlog2.pop %v359
        %v361 = vmul.f32 %v360, 0.6931472
        %v362 = vsub.f32 0.0, %v361
        %v363 = vmul.f32 %v296, %v353
        %s364 = scalar_lea.vmem %s227, 40 [#allocation5]
        %v365 = vld [vmem:[%s364] sm:$0xff]
        %v366 = vmul.f32 %v365, %v319
        %v367 = vmul.f32 %v366, %v366
        %v368 = vsub.f32 1.0, %v367
        %v369 = vmax.f32 %v368, %v258
        %v370 = vrsqrt.pop %v369
        %v371 = vmul.f32 %v370, %v369
        %v372 = vmul.f32 %v371, %v370
        %v373 = vmul.f32 0.5, %v372
        %v374 = vsub.f32 1.5, %v373
        %v375 = vmul.f32 %v370, %v374
        %vm376 = vweird.f32 %v369
        %vm377 = vweird.f32 %v370
        %vm378 = vmor %vm376, %vm377
        %v379 = vsel %vm378, %v370, %v375
        %v380 = vmul.f32 %v319, %v379
        %s381 = sld [smem:[#allocation2 + $0x12]]
        %v382 = vstv %s381
        %v383 = vmul.f32 %v382, %v277
        %s384 = sld [smem:[#allocation2 + $0x13]]
        %v385 = vstv %s384
        %v386 = vmul.f32 %v385, %v331
        %v387 = vadd.f32 %v383, %v386
        %s388 = sld [smem:[#allocation2 + $0x2]]
        %v389 = vstv %s388
        %v390 = vadd.f32 %v387, %v389
        %v391 = vtanh.pop %v390
        %v392 = vmul.f32 %v391, 0.45
        %v393 = vmul.f32 %v366, %v367
        %v394 = vsub.f32 %v366, %v393
        %v395 = vmul.f32 %v392, %v394
        %v396 = vadd.f32 %v366, %v395
        %v397 = vmul.f32 %v367, 3.0
        %v398 = vsub.f32 1.0, %v397
        %v399 = vmul.f32 %v392, %v398
        %v400 = vadd.f32 %v399, 1.0
        %v401 = vmul.f32 %v336, %v400
        %v402 = vmul.f32 %v396, %v396
        %v403 = vsub.f32 1.0, %v402
        %v404 = vmax.f32 %v403, %v258
        %v405 = vmul.f32 %v396, %v363
        %s406 = scalar_lea.vmem %s245, 40 [#allocation6]
        %407 = vst [vmem:[%s406] sm:$0xff] %v405
        %v408 = vrsqrt.pop %v404
        %v409 = vmul.f32 %v408, %v404
        %v410 = vmul.f32 %v409, %v408
        %v411 = vmul.f32 0.5, %v410
        %v412 = vsub.f32 1.5, %v411
        %v413 = vmul.f32 %v408, %v412
        %vm414 = vweird.f32 %v404
        %vm415 = vweird.f32 %v408
        %vm416 = vmor %vm414, %vm415
        %v417 = vsel %vm416, %v408, %v413
        %v418 = vmul.f32 %v404, %v417
        %v419 = vmul.f32 %v369, %v379
        %v420 = vmul.f32 %v419, %v417
        %v421 = vmul.f32 %v420, %v420
        %v422 = vmul.f32 %v421, %v420
        %v423 = vmul.f32 %v363, %v418
        %s424 = scalar_lea.vmem %s227, 8 [#allocation5]
        %v425 = vld [vmem:[%s424] sm:$0xff]
        %v426 = vmul.f32 %v425, %v380
        %v427 = vmul.f32 %v426, %v426
        %v428 = vsub.f32 1.0, %v427
        %v429 = vmax.f32 %v428, %v258
        %v430 = vrsqrt.pop %v429
        %v431 = vmul.f32 %v430, %v429
        %v432 = vmul.f32 %v431, %v430
        %v433 = vmul.f32 0.5, %v432
        %v434 = vsub.f32 1.5, %v433
        %v435 = vmul.f32 %v430, %v434
        %vm436 = vweird.f32 %v429
        %vm437 = vweird.f32 %v430
        %vm438 = vmor %vm436, %vm437
        %v439 = vsel %vm438, %v430, %v435
        %v440 = vmul.f32 %v380, %v439
        %s441 = sld [smem:[#allocation2 + $0x18]]
        %v442 = vstv %s441
        %v443 = vmul.f32 %v442, %v277
        %s444 = sld [smem:[#allocation2 + $0x19]]
        %v445 = vstv %s444
        %v446 = vmul.f32 %v445, %v331
        %v447 = vadd.f32 %v443, %v446
        %s448 = sld [smem:[#allocation2 + $0x1a]]
        %v449 = vstv %s448
        %v450 = vmul.f32 %v449, %v396
        %v451 = vadd.f32 %v447, %v450
        %s452 = sld [smem:[#allocation2 + $0x3]]
        %v453 = vstv %s452
        %v454 = vadd.f32 %v451, %v453
        %v455 = vtanh.pop %v454
        %v456 = vmul.f32 %v455, 0.45
        %v457 = vmul.f32 %v426, %v427
        %v458 = vsub.f32 %v426, %v457
        %v459 = vmul.f32 %v456, %v458
        %v460 = vadd.f32 %v426, %v459
        %v461 = vmul.f32 %v427, 3.0
        %v462 = vsub.f32 1.0, %v461
        %v463 = vmul.f32 %v456, %v462
        %v464 = vadd.f32 %v463, 1.0
        %v465 = vmul.f32 %v401, %v464
        %v466 = vmul.f32 %v460, %v460
        %v467 = vsub.f32 1.0, %v466
        %v468 = vmax.f32 %v467, %v258
        %v469 = vmul.f32 %v460, %v423
        %s470 = scalar_lea.vmem %s245, 8 [#allocation6]
        %471 = vst [vmem:[%s470] sm:$0xff] %v469
        %v472 = vrsqrt.pop %v468
        %v473 = vmul.f32 %v472, %v468
        %v474 = vmul.f32 %v473, %v472
        %v475 = vmul.f32 0.5, %v474
        %v476 = vsub.f32 1.5, %v475
        %v477 = vmul.f32 %v472, %v476
        %vm478 = vweird.f32 %v468
        %vm479 = vweird.f32 %v472
        %vm480 = vmor %vm478, %vm479
        %v481 = vsel %vm480, %v472, %v477
        %v482 = vmul.f32 %v468, %v481
        %v483 = vmul.f32 %v429, %v439
        %v484 = vmul.f32 %v483, %v481
        %v485 = vmul.f32 %v484, %v484
        %v486 = vmul.f32 %v422, %v485
        %v487 = vmul.f32 %v423, %v482
        %s488 = scalar_lea.vmem %s227, 32 [#allocation5]
        %v489 = vld [vmem:[%s488] sm:$0xff]
        %v490 = vmul.f32 %v489, %v440
        %v491 = vmul.f32 %v490, %v490
        %v492 = vsub.f32 1.0, %v491
        %v493 = vmax.f32 %v492, %v258
        %v494 = vrsqrt.pop %v493
        %v495 = vmul.f32 %v494, %v493
        %v496 = vmul.f32 %v495, %v494
        %v497 = vmul.f32 0.5, %v496
        %v498 = vsub.f32 1.5, %v497
        %v499 = vmul.f32 %v494, %v498
        %vm500 = vweird.f32 %v493
        %vm501 = vweird.f32 %v494
        %vm502 = vmor %vm500, %vm501
        %v503 = vsel %vm502, %v494, %v499
        %v504 = vmul.f32 %v440, %v503
        %s505 = sld [smem:[#allocation2 + $0x1e]]
        %v506 = vstv %s505
        %v507 = vmul.f32 %v506, %v277
        %s508 = sld [smem:[#allocation2 + $0x1f]]
        %v509 = vstv %s508
        %v510 = vmul.f32 %v509, %v331
        %v511 = vadd.f32 %v507, %v510
        %s512 = sld [smem:[#allocation2 + $0x20]]
        %v513 = vstv %s512
        %v514 = vmul.f32 %v513, %v396
        %v515 = vadd.f32 %v511, %v514
        %s516 = sld [smem:[#allocation2 + $0x21]]
        %v517 = vstv %s516
        %v518 = vmul.f32 %v517, %v460
        %v519 = vadd.f32 %v515, %v518
        %s520 = sld [smem:[#allocation2 + $0x4]]
        %v521 = vstv %s520
        %v522 = vadd.f32 %v519, %v521
        %v523 = vtanh.pop %v522
        %v524 = vmul.f32 %v523, 0.45
        %v525 = vmul.f32 %v490, %v491
        %v526 = vsub.f32 %v490, %v525
        %v527 = vmul.f32 %v524, %v526
        %v528 = vadd.f32 %v490, %v527
        %v529 = vmul.f32 %v491, 3.0
        %v530 = vsub.f32 1.0, %v529
        %v531 = vmul.f32 %v524, %v530
        %v532 = vadd.f32 %v531, 1.0
        %v533 = vmul.f32 %v465, %v532
        %v534 = vmul.f32 %v528, %v528
        %v535 = vsub.f32 1.0, %v534
        %v536 = vmax.f32 %v535, %v258
        %v537 = vmul.f32 %v528, %v487
        %s538 = scalar_lea.vmem %s245, 32 [#allocation6]
        %539 = vst [vmem:[%s538] sm:$0xff] %v537
        %v540 = vrsqrt.pop %v536
        %v541 = vmul.f32 %v540, %v536
        %v542 = vmul.f32 %v541, %v540
        %v543 = vmul.f32 0.5, %v542
        %v544 = vsub.f32 1.5, %v543
        %v545 = vmul.f32 %v540, %v544
        %vm546 = vweird.f32 %v536
        %vm547 = vweird.f32 %v540
        %vm548 = vmor %vm546, %vm547
        %v549 = vsel %vm548, %v540, %v545
        %v550 = vmul.f32 %v536, %v549
        %v551 = vmul.f32 %v493, %v503
        %v552 = vmul.f32 %v551, %v549
        %v553 = vmul.f32 %v486, %v552
        %v554 = vlog2.pop %v553
        %v555 = vmul.f32 %v554, 0.6931472
        %v556 = vsub.f32 %v362, %v555
        %v557 = vmul.f32 %v487, %v550
        %s558 = scalar_lea.vmem %s227, 48 [#allocation5]
        %v559 = vld [vmem:[%s558] sm:$0xff]
        %v560 = vmul.f32 %v559, %v504
        %v561 = vmul.f32 %v560, %v560
        %v562 = vsub.f32 1.0, %v561
        %v563 = vmax.f32 %v562, %v258
        %v564 = vrsqrt.pop %v563
        %v565 = vmul.f32 %v564, %v563
        %v566 = vmul.f32 %v565, %v564
        %v567 = vmul.f32 0.5, %v566
        %v568 = vsub.f32 1.5, %v567
        %v569 = vmul.f32 %v564, %v568
        %vm570 = vweird.f32 %v563
        %vm571 = vweird.f32 %v564
        %vm572 = vmor %vm570, %vm571
        %v573 = vsel %vm572, %v564, %v569
        %v574 = vmul.f32 %v504, %v573
        %s575 = sld [smem:[#allocation2 + $0x24]]
        %v576 = vstv %s575
        %v577 = vmul.f32 %v576, %v277
        %s578 = sld [smem:[#allocation2 + $0x25]]
        %v579 = vstv %s578
        %v580 = vmul.f32 %v579, %v331
        %v581 = vadd.f32 %v577, %v580
        %s582 = sld [smem:[#allocation2 + $0x26]]
        %v583 = vstv %s582
        %v584 = vmul.f32 %v583, %v396
        %v585 = vadd.f32 %v581, %v584
        %s586 = sld [smem:[#allocation2 + $0x27]]
        %v587 = vstv %s586
        %v588 = vmul.f32 %v587, %v460
        %v589 = vadd.f32 %v585, %v588
        %s590 = sld [smem:[#allocation2 + $0x28]]
        %v591 = vstv %s590
        %v592 = vmul.f32 %v591, %v528
        %v593 = vadd.f32 %v589, %v592
        %s594 = sld [smem:[#allocation2 + $0x5]]
        %v595 = vstv %s594
        %v596 = vadd.f32 %v593, %v595
        %v597 = vtanh.pop %v596
        %v598 = vmul.f32 %v597, 0.45
        %v599 = vmul.f32 %v560, %v561
        %v600 = vsub.f32 %v560, %v599
        %v601 = vmul.f32 %v598, %v600
        %v602 = vadd.f32 %v560, %v601
        %v603 = vmul.f32 %v561, 3.0
        %v604 = vsub.f32 1.0, %v603
        %v605 = vmul.f32 %v598, %v604
        %v606 = vadd.f32 %v605, 1.0
        %v607 = vmul.f32 %v533, %v606
        %v608 = vmul.f32 %v602, %v602
        %v609 = vsub.f32 1.0, %v608
        %v610 = vmax.f32 %v609, %v258
        %v611 = vmul.f32 %v602, %v557
        %s612 = scalar_lea.vmem %s245, 48 [#allocation6]
        %613 = vst [vmem:[%s612] sm:$0xff] %v611
        %v614 = vrsqrt.pop %v610
        %v615 = vmul.f32 %v614, %v610
        %v616 = vmul.f32 %v615, %v614
        %v617 = vmul.f32 0.5, %v616
        %v618 = vsub.f32 1.5, %v617
        %v619 = vmul.f32 %v614, %v618
        %v620 = vmul.f32 %v610, %v619
        %vm621 = vcmp.eq.f32.partialorder %v610, inf
        %v622 = vsel %vm621, %v610, %v620
        %vm623 = vcmp.eq.f32.partialorder %v610, 0.0
        %v624 = vand.u32 %v610, 2147483648
        %v625 = vsel %vm623, %v624, %v622
        %v626 = vmul.f32 %v557, %v625
        %s627 = scalar_lea.vmem %s227, 16 [#allocation5]
        %v628 = vld [vmem:[%s627] sm:$0xff]
        %v629 = vmul.f32 %v628, %v574
        %s630 = scalar_lea.vmem %s227, 56 [#allocation5]
        %v631 = vld [vmem:[%s630] sm:$0xff]
        %v632 = vmul.f32 %v631, %v574
        %s633 = sld [smem:[#allocation2 + $0x2a]]
        %v634 = vstv %s633
        %v635 = vmul.f32 %v634, %v277
        %s636 = sld [smem:[#allocation2 + $0x30]]
        %v637 = vstv %s636
        %v638 = vmul.f32 %v637, %v277
        %s639 = sld [smem:[#allocation2 + $0x2b]]
        %v640 = vstv %s639
        %v641 = vmul.f32 %v640, %v331
        %v642 = vadd.f32 %v635, %v641
        %s643 = sld [smem:[#allocation2 + $0x31]]
        %v644 = vstv %s643
        %v645 = vmul.f32 %v644, %v331
        %v646 = vadd.f32 %v638, %v645
        %s647 = sld [smem:[#allocation2 + $0x2c]]
        %v648 = vstv %s647
        %v649 = vmul.f32 %v648, %v396
        %v650 = vadd.f32 %v642, %v649
        %s651 = sld [smem:[#allocation2 + $0x32]]
        %v652 = vstv %s651
        %v653 = vmul.f32 %v652, %v396
        %v654 = vadd.f32 %v646, %v653
        %s655 = sld [smem:[#allocation2 + $0x2d]]
        %v656 = vstv %s655
        %v657 = vmul.f32 %v656, %v460
        %v658 = vadd.f32 %v650, %v657
        %s659 = sld [smem:[#allocation2 + $0x33]]
        %v660 = vstv %s659
        %v661 = vmul.f32 %v660, %v460
        %v662 = vadd.f32 %v654, %v661
        %s663 = sld [smem:[#allocation2 + $0x2e]]
        %v664 = vstv %s663
        %v665 = vmul.f32 %v664, %v528
        %v666 = vadd.f32 %v658, %v665
        %s667 = sld [smem:[#allocation2 + $0x34]]
        %v668 = vstv %s667
        %v669 = vmul.f32 %v668, %v528
        %v670 = vadd.f32 %v662, %v669
        %s671 = sld [smem:[#allocation2 + $0x2f]]
        %v672 = vstv %s671
        %v673 = vmul.f32 %v672, %v602
        %v674 = vadd.f32 %v666, %v673
        %s675 = sld [smem:[#allocation2 + $0x35]]
        %v676 = vstv %s675
        %v677 = vmul.f32 %v676, %v602
        %v678 = vadd.f32 %v670, %v677
        %s679 = sld [smem:[#allocation2 + $0x36]]
        %v680 = vstv %s679
        %v681 = vadd.f32 %v674, %v680
        %s682 = sld [smem:[#allocation2 + $0x37]]
        %v683 = vstv %s682
        %v684 = vadd.f32 %v678, %v683
        %v685 = vtanh.pop %v681
        %v686 = vmul.f32 %v685, 0.6
        %v687 = vtanh.pop %v684
        %v688 = vmul.f32 %v687, 0.6
        %v689 = vmul.f32 %v629, %v629
        %v690 = vmul.f32 %v632, %v632
        %v691 = vadd.f32 %v689, %v690
        %v692 = vrsqrt.pop %v691
        %v693 = vmul.f32 %v692, %v691
        %v694 = vmul.f32 %v693, %v692
        %v695 = vmul.f32 0.5, %v694
        %v696 = vsub.f32 1.5, %v695
        %v697 = vmul.f32 %v692, %v696
        %vm698 = vweird.f32 %v691
        %vm699 = vweird.f32 %v692
        %vm700 = vmor %vm698, %vm699
        %v701 = vsel %vm700, %v692, %v697
        %v702 = vmul.f32 %v629, %v701
        %v703 = vmul.f32 %v632, %v701
        %v704 = vmul.f32 %v686, %v702
        %v705 = vsub.f32 1.0, %v704
        %v706 = vmul.f32 %v688, %v703
        %v707 = vsub.f32 %v705, %v706
        %v708 = vmul.f32 %v686, %v703
        %v709 = vmul.f32 %v688, %v702
        %v710 = vsub.f32 %v708, %v709
        %v711 = vmul.f32 %v707, %v707
        %v712 = vmul.f32 %v710, %v710
        %v713 = vadd.f32 %v711, %v712
        %v714 = vrcp.pop %v713
        %v715 = vmul.f32 %v713, %v714
        %v716 = vsub.f32 1.0, %v715
        %v717 = vmul.f32 %v714, %v716
        %v718 = vadd.f32 %v714, %v717
        %vm719 = vweird.f32 %v713
        %vm720 = vweird.f32 %v714
        %vm721 = vmor %vm719, %vm720
        %v722 = vsel %vm721, %v714, %v718
        %v723 = vand.u32 2147483647, %v713
        %vm724 = vcmp.eq.f32.partialorder %v723, 8.507059e+37
        %v725 = vand.u32 %v713, 2147483648
        %v726 = vor.u32 1.1754944e-38, %v725
        %v727 = vsel %vm724, %v726, %v722
        %v728 = vmul.f32 1.0, %v727
        %v729 = vsub.f32 %v702, %v686
        %v730 = vsub.f32 %v703, %v688
        %v731 = vmul.f32 %v729, %v707
        %v732 = vmul.f32 %v730, %v710
        %v733 = vsub.f32 %v731, %v732
        %v734 = vmul.f32 %v733, %v728
        %v735 = vmul.f32 %v729, %v710
        %v736 = vmul.f32 %v730, %v707
        %v737 = vadd.f32 %v735, %v736
        %v738 = vmul.f32 %v737, %v728
        %v739 = vmul.f32 %v686, %v686
        %v740 = vsub.f32 1.0, %v739
        %v741 = vmul.f32 %v688, %v688
        %v742 = vsub.f32 %v740, %v741
        %v743 = vmul.f32 %v742, %v728
        %v744 = vmul.f32 %v607, %v743
        %s745 = sld [smem:[#allocation2 + $0x38]]
        %s746 = sld [smem:[#allocation2 + $0x39]]
        %v747 = vstv %s745
        %v748 = vmul.f32 %v747, %v734
        %v749 = vstv %s746
        %v750 = vmul.f32 %v749, %v738
        %v751 = vsub.f32 %v748, %v750
        %v752 = vmul.f32 %v749, %v734
        %v753 = vmul.f32 %v747, %v738
        %v754 = vadd.f32 %v752, %v753
        %v755 = vmul.f32 %v751, %v626
        %s756 = scalar_lea.vmem %s245, 16 [#allocation6]
        %757 = vst [vmem:[%s756] sm:$0xff] %v755
        %v758 = vmul.f32 %v754, %v626
        %s759 = scalar_lea.vmem %s245, 56 [#allocation6]
        %760 = vst [vmem:[%s759] sm:$0xff] %v758
        %v761 = vlog2.pop %v744
        %v762 = vmul.f32 %v761, 0.6931472
        %v763 = vadd.f32 %v556, %v762
        %764 = vst [vmem:[%s252] sm:$0xff] %v763
        %s765 = sand.u32 %s74, 1
        %s766 = sand.u32 %s74, 1
        %s767 = smul.addr %s766, 64
        %s768 = scalar_lea.vmem [#allocation6], %s767
        %s769 = sand.u32 %s100, 1
        %s770 = scalar_lea.sflag [#allocation3], %s769
        %s771 = sand.u32 %s100, 1
        %s772 = smul.addr %s771, 8
        %s773 = scalar_lea.vmem [#allocation7], %s772
        // Predicated region
        $region71: #{recursive_flow_sd_forward.1} parent=61 // pred_check
          %p774 = pneg %p84
        $region72: #{recursive_flow_sd_forward.1} parent=61 // pred_check_branch
          %776 = sbr.rel (%p774) target = $region74
        $region73: #{recursive_flow_sd_forward.1} parent=61 // pred_region
          %s777 = smul.addr %s19, 8
          %s778 = scalar_lea.vmem %s2, %s777
          // Predicated region
          $region75: #{recursive_flow_sd_forward.1} parent=73 // pred_check
            _
          $region76: #{recursive_flow_sd_forward.1} parent=73 // pred_check_branch
            %780 = sbr.rel (0) target = $region78
          $region77: #{recursive_flow_sd_forward.1} parent=73 // pred_region
            // Predicated region
            $region79: #{recursive_flow_sd_forward.1} parent=77 // pred_check
              _
            $region80: #{recursive_flow_sd_forward.1} parent=77 // pred_check_branch
              %782 = sbr.rel (0) target = $region82
            $region81: #{recursive_flow_sd_forward.1} parent=77 // pred_region
              // Predicated region
              $region94: #{recursive_flow_sd_forward.1} parent=81 // pred_check
                _
              $region95: #{recursive_flow_sd_forward.1} parent=81 // pred_check_branch
                %812 = sbr.rel (0) target = $region97
              $region96: #{recursive_flow_sd_forward.1} parent=81 // pred_region
                loop: start=0, step=1, limit=1
                $region98: #{recursive_flow_sd_forward.1} parent=96 // loop_pre_header
                  _
                $region99: #{recursive_flow_sd_forward.1} parent=96 // loop_header
                  %s814 = sphi 0, %s818
                  %p815 = scmp.ge.s32.totalorder %s814, 1
                  %s819 = sphi %s768, %s768
                  %s820 = sphi %s778, %s778
                $region100: #{recursive_flow_sd_forward.1} parent=96 // loop_header_branch
                  %817 = sbr.rel (%p815) target = $region104
                $region101: #{recursive_flow_sd_forward.1} parent=96 // loop_body
                  %v821 = vld [vmem:[%s819] sm:$0xff]
                  %822 = vst [vmem:[%s820] sm:$0xff] %v821
                  %v823 = vld [vmem:[%s819 + $0x8] sm:$0xff]
                  %824 = vst [vmem:[%s820 + $0x10] sm:$0xff] %v823
                  %v825 = vld [vmem:[%s819 + $0x10] sm:$0xff]
                  %826 = vst [vmem:[%s820 + $0x20] sm:$0xff] %v825
                  %v827 = vld [vmem:[%s819 + $0x18] sm:$0xff]
                  %828 = vst [vmem:[%s820 + $0x30] sm:$0xff] %v827
                  %v829 = vld [vmem:[%s819 + $0x20] sm:$0xff]
                  %830 = vst [vmem:[%s820 + $0x40] sm:$0xff] %v829
                  %v831 = vld [vmem:[%s819 + $0x28] sm:$0xff]
                  %832 = vst [vmem:[%s820 + $0x50] sm:$0xff] %v831
                  %v833 = vld [vmem:[%s819 + $0x30] sm:$0xff]
                  %834 = vst [vmem:[%s820 + $0x60] sm:$0xff] %v833
                  %v835 = vld [vmem:[%s819 + $0x38] sm:$0xff]
                  %836 = vst [vmem:[%s820 + $0x70] sm:$0xff] %v835
                $region102: #{recursive_flow_sd_forward.1} parent=96 // loop_footer
                  %s818 = sadd.s32 1, %s814
                $region103: #{recursive_flow_sd_forward.1} parent=96 // loop_footer_branch
                  %813 = sbr.rel target = $region99
                $region104: #{recursive_flow_sd_forward.1} parent=96 // loop_exit
                  _
              $region97: #{recursive_flow_sd_forward.1} parent=81 // pred_fallthru
                _
              // Predicated region
              $region105: #{recursive_flow_sd_forward.1} parent=81 // pred_check
                _
              $region106: #{recursive_flow_sd_forward.1} parent=81 // pred_check_branch
                %838 = sbr.rel target = $region108
              $region107: #{recursive_flow_sd_forward.1} parent=81 // pred_region
                _
              $region108: #{recursive_flow_sd_forward.1} parent=81 // pred_fallthru
                _
            $region82: #{recursive_flow_sd_forward.1} parent=77 // pred_fallthru
              _
            // Predicated region
            $region83: #{recursive_flow_sd_forward.1} parent=77 // pred_check
              _
            $region84: #{recursive_flow_sd_forward.1} parent=77 // pred_check_branch
              %784 = sbr.rel target = $region86
            $region85: #{recursive_flow_sd_forward.1} parent=77 // pred_region
              %s786 = ssub.s32 256, 1
              loop: start=0, step=1, limit=1
              $region87: #{recursive_flow_sd_forward.1} parent=85 // loop_pre_header
                _
              $region88: #{recursive_flow_sd_forward.1} parent=85 // loop_header
                %s788 = sphi 0, %s792
                %p789 = scmp.ge.s32.totalorder %s788, 1
                %s793 = sphi %s768, %s768
                %s794 = sphi %s778, %s778
              $region89: #{recursive_flow_sd_forward.1} parent=85 // loop_header_branch
                %791 = sbr.rel (%p789) target = $region93
              $region90: #{recursive_flow_sd_forward.1} parent=85 // loop_body
                %v795 = vld [vmem:[%s793] sm:%s786]
                %796 = vst [vmem:[%s794] sm:%s786] %v795
                %v797 = vld [vmem:[%s793 + $0x8] sm:%s786]
                %798 = vst [vmem:[%s794 + $0x10] sm:%s786] %v797
                %v799 = vld [vmem:[%s793 + $0x10] sm:%s786]
                %800 = vst [vmem:[%s794 + $0x20] sm:%s786] %v799
                %v801 = vld [vmem:[%s793 + $0x18] sm:%s786]
                %802 = vst [vmem:[%s794 + $0x30] sm:%s786] %v801
                %v803 = vld [vmem:[%s793 + $0x20] sm:%s786]
                %804 = vst [vmem:[%s794 + $0x40] sm:%s786] %v803
                %v805 = vld [vmem:[%s793 + $0x28] sm:%s786]
                %806 = vst [vmem:[%s794 + $0x50] sm:%s786] %v805
                %v807 = vld [vmem:[%s793 + $0x30] sm:%s786]
                %808 = vst [vmem:[%s794 + $0x60] sm:%s786] %v807
                %v809 = vld [vmem:[%s793 + $0x38] sm:%s786]
                %810 = vst [vmem:[%s794 + $0x70] sm:%s786] %v809
              $region91: #{recursive_flow_sd_forward.1} parent=85 // loop_footer
                %s792 = sadd.s32 1, %s788
              $region92: #{recursive_flow_sd_forward.1} parent=85 // loop_footer_branch
                %787 = sbr.rel target = $region88
              $region93: #{recursive_flow_sd_forward.1} parent=85 // loop_exit
                _
            $region86: #{recursive_flow_sd_forward.1} parent=77 // pred_fallthru
              _
          $region78: #{recursive_flow_sd_forward.1} parent=73 // pred_fallthru
            _
          %839 = vnop
        $region74: #{recursive_flow_sd_forward.1} parent=61 // pred_fallthru
          _
        // Predicated region
        $region109: #{recursive_flow_sd_forward.1} parent=61 // pred_check
          %p840 = pneg %p110
        $region110: #{recursive_flow_sd_forward.1} parent=61 // pred_check_branch
          %842 = sbr.rel (%p840) target = $region112
        $region111: #{recursive_flow_sd_forward.1} parent=61 // pred_region
          %844 = vsyncadd %s770, 0
          %s845 = smul.addr %s19, 8
          %s846 = scalar_lea.hbm %s3, %s845
          %s848 = sshll.u32 %s773, 4
          %s849 = int_to_ptr.vmem [resolvable:$true] %s848
          %s850 = sshll.u32 %s846, 4
          %s851 = int_to_ptr.hbm [resolvable:$true] %s850
          %853 = dma.vmem_to_hbm [thread:$0]  %s849, 128, %s851, %s770
        $region112: #{recursive_flow_sd_forward.1} parent=61 // pred_fallthru
          _
      $region62: #{recursive_flow_sd_forward.1} parent=5 // pred_fallthru
        _
      %p854 = scmp.le.s32.totalorder 2, %s14
      // Predicated region
      $region113: #{recursive_flow_sd_forward.1} parent=5 // pred_check
        %p855 = pneg %p854
      $region114: #{recursive_flow_sd_forward.1} parent=5 // pred_check_branch
        %857 = sbr.rel (%p855) target = $region116
      $region115: #{recursive_flow_sd_forward.1} parent=5 // pred_region
        %s858 = ssub.s32 %s14, 2
        // Predicated region
        $region117: #{recursive_flow_sd_forward.1} parent=115 // pred_check
          %p859 = pneg %p90
        $region118: #{recursive_flow_sd_forward.1} parent=115 // pred_check_branch
          %861 = sbr.rel (%p859) target = $region120
        $region119: #{recursive_flow_sd_forward.1} parent=115 // pred_region
          %s862 = sand.u32 %s75, 1
          %s863 = sand.u32 %s75, 1
          %s864 = smul.addr %s863, 64
          %s865 = scalar_lea.vmem [#allocation6], %s864
        $region120: #{recursive_flow_sd_forward.1} parent=115 // pred_fallthru
          _
        // Predicated region
        $region121: #{recursive_flow_sd_forward.1} parent=115 // pred_check
          %p866 = pneg %p116
        $region122: #{recursive_flow_sd_forward.1} parent=115 // pred_check_branch
          %868 = sbr.rel (%p866) target = $region124
        $region123: #{recursive_flow_sd_forward.1} parent=115 // pred_region
          %s869 = sand.u32 %s101, 1
          %s870 = scalar_lea.sflag [#allocation3], %s869
          %s871 = sand.u32 %s101, 1
          %s872 = smul.addr %s871, 8
          %s873 = scalar_lea.vmem [#allocation7], %s872
          %875 = dma.done %s870, 128
        $region124: #{recursive_flow_sd_forward.1} parent=115 // pred_fallthru
          _
      $region116: #{recursive_flow_sd_forward.1} parent=5 // pred_fallthru
        _
    $region6: #{recursive_flow_sd_forward.1} parent=1 // loop_footer
      %s18 = sadd.s32 1, %s14
    $region7: #{recursive_flow_sd_forward.1} parent=1 // loop_footer_branch
      %13 = sbr.rel target = $region3
    $region8: #{recursive_flow_sd_forward.1} parent=1 // loop_exit
      _
    %876 = vsyncpa [#allocation3], 1
    %s877 = scalar_lea.sflag [#allocation3], 1
    %878 = vsyncpa %s877, 1
    %879 = vsyncpa [#allocation4], 1
    %s880 = scalar_lea.sflag [#allocation4], 1
    %881 = vsyncpa %s880, 1

</llo_original>
